<compile_context>
chip_gen: v7x
topology: tpu7x:2x2x1
jax: 0.10.0
libtpu: 0.0.40
codegen_flags: <defaults>
</compile_context>

<pallas_src>
import jax
import jax.numpy as jnp
from jax import lax
from jax.experimental import pallas as pl
from jax.experimental.pallas import tpu as pltpu


def gru_generator_kernel(x_ref, h0_ref, wi_all_ref, wh_all_ref,
                         bi_all_ref, bhn_ref, w_heads_ref, b_heads_ref,
                         heads_ref, out2_ref, hN_ref):
    T, Bb, _ = x_ref.shape
    H = h0_ref.shape[-1]

    wi_all = wi_all_ref[...]                      # [F, 3H]  (cols: r | z | n)
    wh_all = wh_all_ref[...]                      # [H, 3H]
    # Pre-broadcast biases once (outside the unrolled loop).
    bi_all = jnp.broadcast_to(bi_all_ref[...], (Bb, 3 * H))   # b_ir+b_hr | b_iz+b_hz | b_in
    bhn = jnp.broadcast_to(bhn_ref[...], (Bb, H))             # b_hn (inside r-gate)

    # --- Hoisted input-side projections -------------------------------------
    # One fused [F,3H] matmul per timestep; none of these depend on h, so they
    # are off the serial critical path and pipeline freely through the MXU.
    x = x_ref[...]                                # [T, Bb, F]
    gi = [jnp.dot(x[t].astype(wi_all.dtype), wi_all,
                  preferred_element_type=jnp.float32) + bi_all
          for t in range(T)]                      # T x [Bb, 3H], f32

    # --- Serial recurrence (statically unrolled, one fused h-matmul / step) --
    h = h0_ref[...]                               # [Bb, H], f32 state
    for t in range(T):
        gh = jnp.dot(h.astype(wh_all.dtype), wh_all,
                     preferred_element_type=jnp.float32)      # [Bb, 3H]
        g = gi[t]
        r = jax.nn.sigmoid(g[:, :H] + gh[:, :H])
        z = jax.nn.sigmoid(g[:, H:2 * H] + gh[:, H:2 * H])
        n = jnp.tanh(g[:, 2 * H:] + r * (gh[:, 2 * H:] + bhn))
        h = (1.0 - z) * n + z * h

    # --- Epilogue: fused, lane-padded output heads (single lane-dense store) -
    heads_ref[...] = (jnp.dot(h.astype(w_heads_ref.dtype), w_heads_ref[...],
                              preferred_element_type=jnp.float32)
                      + b_heads_ref[...])
    out2_ref[...] = jax.nn.sigmoid(h)
    hN_ref[...] = h


def gru_generator_forward(x, h0, params, *, matmul_dtype=jnp.float32,
                          block_b=None):
    """x: [B, T, F] (batch_first, like PyTorch); h0: [num_layers=1, B, H]."""
    B, T, F = x.shape
    H = h0.shape[-1]
    C = params['w_out1'].shape[0]
    HEADS = 128                                   # lane-padded fused-head width

    x_tm = jnp.transpose(x, (1, 0, 2)).astype(matmul_dtype)   # [T, B, F]
    h0_ = h0[0].astype(jnp.float32)                            # [B, H]

    # --- Fused GRU weights / biases (gate order r, z, n) ---------------------
    w_ih, w_hh = params['w_ih'], params['w_hh']                # [3H, F], [3H, H]
    b_ih = params['b_ih'].astype(jnp.float32)
    b_hh = params['b_hh'].astype(jnp.float32)
    wi_all = w_ih.T.astype(matmul_dtype)                       # [F, 3H]
    wh_all = w_hh.T.astype(matmul_dtype)                       # [H, 3H]
    bi_all = jnp.concatenate([b_ih[:H] + b_hh[:H],
                              b_ih[H:2 * H] + b_hh[H:2 * H],
                              b_ih[2 * H:]]).reshape(1, 3 * H)
    bhn = b_hh[2 * H:].reshape(1, H)

    # --- Fused + lane-padded output heads: [out1 (C) | out3 (1) | zeros] -----
    w1 = params['w_out1'].T                                    # [H, C]
    w3 = params['w_out3'].T                                    # [H, 1]
    w_heads = jnp.concatenate(
        [w1, w3, jnp.zeros((H, HEADS - C - 1), jnp.float32)],
        axis=1).astype(matmul_dtype)                           # [H, 128]
    b_heads = jnp.concatenate(
        [params['b_out1'], params['b_out3'],
         jnp.zeros((HEADS - C - 1,), jnp.float32)]).reshape(1, HEADS)

    # --- Batch grid (shards big batches across grid steps / v7x's 2 TCs) -----
    if block_b is None:
        block_b = B
        for cand in (256, 128, 64, 32, 16, 8):
            if B % cand == 0 and B // cand >= 2:
                block_b = cand
                break
    assert B % block_b == 0
    nb = B // block_b

    def full_spec(shape):
        return pl.BlockSpec(shape, lambda b: (0,) * len(shape))

    heads, out2, hN = pl.pallas_call(
        gru_generator_kernel,
        out_shape=(
            jax.ShapeDtypeStruct((B, HEADS), jnp.float32),
            jax.ShapeDtypeStruct((B, H), jnp.float32),
            jax.ShapeDtypeStruct((B, H), jnp.float32),
        ),
        grid=(nb,),
        in_specs=[
            pl.BlockSpec((T, block_b, F), lambda b: (0, b, 0)),   # x (time-major)
            pl.BlockSpec((block_b, H), lambda b: (b, 0)),         # h0
            full_spec((F, 3 * H)),                                # wi_all
            full_spec((H, 3 * H)),                                # wh_all
            full_spec((1, 3 * H)),                                # bi_all
            full_spec((1, H)),                                    # bhn
            full_spec((H, HEADS)),                                # w_heads
            full_spec((1, HEADS)),                                # b_heads
        ],
        out_specs=(
            pl.BlockSpec((block_b, HEADS), lambda b: (b, 0)),
            pl.BlockSpec((block_b, H), lambda b: (b, 0)),
            pl.BlockSpec((block_b, H), lambda b: (b, 0)),
        ),
        compiler_params=pltpu.CompilerParams(
            dimension_semantics=("parallel",)),
    )(x_tm, h0_, wi_all, wh_all, bi_all, bhn, w_heads, b_heads)

    out1 = heads[:, :C]
    out3 = heads[:, C:C + 1]
    new_state = hN[None]                                       # [1, B, H]
    return out1, out2, out3, new_state


def reference_forward(x, h0, params):
    """Pure-JAX reference, mirroring torch.nn.GRU + heads."""
    H = h0.shape[-1]
    w_ih, w_hh, b_ih, b_hh = (params['w_ih'], params['w_hh'],
                              params['b_ih'], params['b_hh'])

    def step(h, x_t):
        gi = x_t @ w_ih.T + b_ih
        gh = h @ w_hh.T + b_hh
        r = jax.nn.sigmoid(gi[:, :H] + gh[:, :H])
        z = jax.nn.sigmoid(gi[:, H:2 * H] + gh[:, H:2 * H])
        n = jnp.tanh(gi[:, 2 * H:] + r * gh[:, 2 * H:])
        h_new = (1.0 - z) * n + z * h
        return h_new, None

    h, _ = lax.scan(step, h0[0], jnp.transpose(x, (1, 0, 2)))
    out1 = h @ params['w_out1'].T + params['b_out1']
    out2 = jax.nn.sigmoid(h)
    out3 = h @ params['w_out3'].T + params['b_out3']
    return out1, out2, out3, h[None]


def init_params(key, num_features, num_units, num_classes):
    H, F, C = num_units, num_features, num_classes
    ks = jax.random.split(key, 16)
    s_gru = 1.0 / jnp.sqrt(H)
    s_lin = 1.0 / jnp.sqrt(H)

    def u(k, shape, s):
        return jax.random.uniform(k, shape, jnp.float32, -s, s)

    params = {
        # nn.GRU parameters (1 layer), gate order: r, z, n
        'w_ih': u(ks[0], (3 * H, F), s_gru),
        'w_hh': u(ks[1], (3 * H, H), s_gru),
        'b_ih': u(ks[2], (3 * H,), s_gru),
        'b_hh': u(ks[3], (3 * H,), s_gru),
        # output heads actually used by the forward pass
        'w_out1': u(ks[4], (C, H), s_lin),
        'b_out1': u(ks[5], (C,), s_lin),
        'w_out3': u(ks[6], (1, H), s_lin),
        'b_out3': u(ks[7], (1,), s_lin),
        # dense_layer1/2/3 exist in __init__ but their outputs are discarded
        # in forward(); created for shape fidelity, unused in compute.
        'w_d1': u(ks[8], (128, H), s_lin), 'b_d1': u(ks[9], (128,), s_lin),
        'w_d2': u(ks[10], (128, H), s_lin), 'b_d2': u(ks[11], (128,), s_lin),
        'w_d3': u(ks[12], (128, H), s_lin), 'b_d3': u(ks[13], (128,), s_lin),
    }
    return params


if __name__ == "__main__":
    num_features = 4     # input_size
    num_units = 32       # hidden_size
    num_classes = 3
    batch, seq = 2, 8

    key = jax.random.PRNGKey(0)
    k_params, k_x = jax.random.split(key)
    params = init_params(k_params, num_features, num_units, num_classes)

    x = jax.random.normal(k_x, (batch, seq, num_features), jnp.float32)
    h0 = jnp.zeros((1, batch, num_units), jnp.float32)   # init_states()

    out1, out2, out3, new_state = jax.block_until_ready(
        gru_generator_forward(x, h0, params))

    r1, r2, r3, rh = reference_forward(x, h0, params)
    assert out1.shape == (batch, num_classes)
    assert out2.shape == (batch, num_units)
    assert out3.shape == (batch, 1)
    assert new_state.shape == (1, batch, num_units)
    assert jnp.allclose(out1, r1, atol=1e-5, rtol=1e-5)
    assert jnp.allclose(out2, r2, atol=1e-5, rtol=1e-5)
    assert jnp.allclose(out3, r3, atol=1e-5, rtol=1e-5)
    assert jnp.allclose(new_state, rh, atol=1e-5, rtol=1e-5)

    print("KERNEL_OK")
</pallas_src>

<mosaic_0001>
module attributes {stable_mosaic.version = 11 : i64} {
  func.func @gru_generator_kernel(%arg0: i32, %arg1: memref<8x2x4xf32, #tpu.memory_space<vmem>>, %arg2: memref<2x32xf32, #tpu.memory_space<vmem>>, %arg3: memref<4x96xf32, #tpu.memory_space<vmem>>, %arg4: memref<32x96xf32, #tpu.memory_space<vmem>>, %arg5: memref<1x96xf32, #tpu.memory_space<vmem>>, %arg6: memref<1x32xf32, #tpu.memory_space<vmem>>, %arg7: memref<32x128xf32, #tpu.memory_space<vmem>>, %arg8: memref<1x128xf32, #tpu.memory_space<vmem>>, %arg9: memref<2x128xf32, #tpu.memory_space<vmem>>, %arg10: memref<2x32xf32, #tpu.memory_space<vmem>>, %arg11: memref<2x32xf32, #tpu.memory_space<vmem>>) attributes {dimension_semantics = [#tpu.dimension_semantics<parallel>], iteration_bounds = array<i64: 1>, scalar_prefetch = 0 : i64, scratch_operands = 0 : i64, tpu.core_type = #tpu.core_type<tc>, window_params = [{transform_indices = @transform_0, window_bounds = array<i64: 8, 2, 4>}, {transform_indices = @transform_1, window_bounds = array<i64: 2, 32>}, {pipeline_mode = #tpu.pipeline_mode<synchronous>, transform_indices = @transform_2, window_bounds = array<i64: 4, 96>}, {pipeline_mode = #tpu.pipeline_mode<synchronous>, transform_indices = @transform_3, window_bounds = array<i64: 32, 96>}, {pipeline_mode = #tpu.pipeline_mode<synchronous>, transform_indices = @transform_4, window_bounds = array<i64: 1, 96>}, {pipeline_mode = #tpu.pipeline_mode<synchronous>, transform_indices = @transform_5, window_bounds = array<i64: 1, 32>}, {pipeline_mode = #tpu.pipeline_mode<synchronous>, transform_indices = @transform_6, window_bounds = array<i64: 32, 128>}, {pipeline_mode = #tpu.pipeline_mode<synchronous>, transform_indices = @transform_7, window_bounds = array<i64: 1, 128>}, {transform_indices = @transform_8, window_bounds = array<i64: 2, 128>}, {transform_indices = @transform_9, window_bounds = array<i64: 2, 32>}, {transform_indices = @transform_10, window_bounds = array<i64: 2, 32>}]} {
    %c0 = arith.constant 0 : index
    %c0_0 = arith.constant 0 : index
    %0 = vector.load %arg3[%c0, %c0_0] : memref<4x96xf32, #tpu.memory_space<vmem>>, vector<4x96xf32>
    %c0_1 = arith.constant 0 : index
    %c0_2 = arith.constant 0 : index
    %1 = vector.load %arg4[%c0_1, %c0_2] : memref<32x96xf32, #tpu.memory_space<vmem>>, vector<32x96xf32>
    %c0_3 = arith.constant 0 : index
    %c0_4 = arith.constant 0 : index
    %2 = vector.load %arg5[%c0_3, %c0_4] : memref<1x96xf32, #tpu.memory_space<vmem>>, vector<1x96xf32>
    %3 = vector.shape_cast %2 : vector<1x96xf32> to vector<1x96xf32>
    %4 = vector.broadcast %3 : vector<1x96xf32> to vector<2x96xf32>
    %c0_5 = arith.constant 0 : index
    %c0_6 = arith.constant 0 : index
    %5 = vector.load %arg6[%c0_5, %c0_6] : memref<1x32xf32, #tpu.memory_space<vmem>>, vector<1x32xf32>
    %6 = vector.shape_cast %5 : vector<1x32xf32> to vector<1x32xf32>
    %7 = vector.broadcast %6 : vector<1x32xf32> to vector<2x32xf32>
    %c0_7 = arith.constant 0 : index
    %c0_8 = arith.constant 0 : index
    %c0_9 = arith.constant 0 : index
    %8 = vector.load %arg1[%c0_7, %c0_8, %c0_9] : memref<8x2x4xf32, #tpu.memory_space<vmem>>, vector<8x2x4xf32>
    %9 = vector.extract_strided_slice %8 {offsets = [0, 0, 0], sizes = [1, 2, 4], strides = [1, 1, 1]} : vector<8x2x4xf32> to vector<1x2x4xf32>
    %10 = vector.shape_cast %9 : vector<1x2x4xf32> to vector<2x4xf32>
    %cst = arith.constant dense<0.000000e+00> : vector<2x96xf32>
    %11 = tpu.matmul %10, %0, %cst {dimension_numbers = #tpu.dot_dimension_numbers<[1], [0], [0], [1], [0, 0, 1, 1], [], []>} : vector<2x4xf32>, vector<4x96xf32>, vector<2x96xf32> -> vector<2x96xf32>
    %12 = arith.addf %11, %4 : vector<2x96xf32>
    %13 = vector.extract_strided_slice %8 {offsets = [1, 0, 0], sizes = [1, 2, 4], strides = [1, 1, 1]} : vector<8x2x4xf32> to vector<1x2x4xf32>
    %14 = vector.shape_cast %13 : vector<1x2x4xf32> to vector<2x4xf32>
    %cst_10 = arith.constant dense<0.000000e+00> : vector<2x96xf32>
    %15 = tpu.matmul %14, %0, %cst_10 {dimension_numbers = #tpu.dot_dimension_numbers<[1], [0], [0], [1], [0, 0, 1, 1], [], []>} : vector<2x4xf32>, vector<4x96xf32>, vector<2x96xf32> -> vector<2x96xf32>
    %16 = arith.addf %15, %4 : vector<2x96xf32>
    %17 = vector.extract_strided_slice %8 {offsets = [2, 0, 0], sizes = [1, 2, 4], strides = [1, 1, 1]} : vector<8x2x4xf32> to vector<1x2x4xf32>
    %18 = vector.shape_cast %17 : vector<1x2x4xf32> to vector<2x4xf32>
    %cst_11 = arith.constant dense<0.000000e+00> : vector<2x96xf32>
    %19 = tpu.matmul %18, %0, %cst_11 {dimension_numbers = #tpu.dot_dimension_numbers<[1], [0], [0], [1], [0, 0, 1, 1], [], []>} : vector<2x4xf32>, vector<4x96xf32>, vector<2x96xf32> -> vector<2x96xf32>
    %20 = arith.addf %19, %4 : vector<2x96xf32>
    %21 = vector.extract_strided_slice %8 {offsets = [3, 0, 0], sizes = [1, 2, 4], strides = [1, 1, 1]} : vector<8x2x4xf32> to vector<1x2x4xf32>
    %22 = vector.shape_cast %21 : vector<1x2x4xf32> to vector<2x4xf32>
    %cst_12 = arith.constant dense<0.000000e+00> : vector<2x96xf32>
    %23 = tpu.matmul %22, %0, %cst_12 {dimension_numbers = #tpu.dot_dimension_numbers<[1], [0], [0], [1], [0, 0, 1, 1], [], []>} : vector<2x4xf32>, vector<4x96xf32>, vector<2x96xf32> -> vector<2x96xf32>
    %24 = arith.addf %23, %4 : vector<2x96xf32>
    %25 = vector.extract_strided_slice %8 {offsets = [4, 0, 0], sizes = [1, 2, 4], strides = [1, 1, 1]} : vector<8x2x4xf32> to vector<1x2x4xf32>
    %26 = vector.shape_cast %25 : vector<1x2x4xf32> to vector<2x4xf32>
    %cst_13 = arith.constant dense<0.000000e+00> : vector<2x96xf32>
    %27 = tpu.matmul %26, %0, %cst_13 {dimension_numbers = #tpu.dot_dimension_numbers<[1], [0], [0], [1], [0, 0, 1, 1], [], []>} : vector<2x4xf32>, vector<4x96xf32>, vector<2x96xf32> -> vector<2x96xf32>
    %28 = arith.addf %27, %4 : vector<2x96xf32>
    %29 = vector.extract_strided_slice %8 {offsets = [5, 0, 0], sizes = [1, 2, 4], strides = [1, 1, 1]} : vector<8x2x4xf32> to vector<1x2x4xf32>
    %30 = vector.shape_cast %29 : vector<1x2x4xf32> to vector<2x4xf32>
    %cst_14 = arith.constant dense<0.000000e+00> : vector<2x96xf32>
    %31 = tpu.matmul %30, %0, %cst_14 {dimension_numbers = #tpu.dot_dimension_numbers<[1], [0], [0], [1], [0, 0, 1, 1], [], []>} : vector<2x4xf32>, vector<4x96xf32>, vector<2x96xf32> -> vector<2x96xf32>
    %32 = arith.addf %31, %4 : vector<2x96xf32>
    %33 = vector.extract_strided_slice %8 {offsets = [6, 0, 0], sizes = [1, 2, 4], strides = [1, 1, 1]} : vector<8x2x4xf32> to vector<1x2x4xf32>
    %34 = vector.shape_cast %33 : vector<1x2x4xf32> to vector<2x4xf32>
    %cst_15 = arith.constant dense<0.000000e+00> : vector<2x96xf32>
    %35 = tpu.matmul %34, %0, %cst_15 {dimension_numbers = #tpu.dot_dimension_numbers<[1], [0], [0], [1], [0, 0, 1, 1], [], []>} : vector<2x4xf32>, vector<4x96xf32>, vector<2x96xf32> -> vector<2x96xf32>
    %36 = arith.addf %35, %4 : vector<2x96xf32>
    %37 = vector.extract_strided_slice %8 {offsets = [7, 0, 0], sizes = [1, 2, 4], strides = [1, 1, 1]} : vector<8x2x4xf32> to vector<1x2x4xf32>
    %38 = vector.shape_cast %37 : vector<1x2x4xf32> to vector<2x4xf32>
    %cst_16 = arith.constant dense<0.000000e+00> : vector<2x96xf32>
    %39 = tpu.matmul %38, %0, %cst_16 {dimension_numbers = #tpu.dot_dimension_numbers<[1], [0], [0], [1], [0, 0, 1, 1], [], []>} : vector<2x4xf32>, vector<4x96xf32>, vector<2x96xf32> -> vector<2x96xf32>
    %40 = arith.addf %39, %4 : vector<2x96xf32>
    %c0_17 = arith.constant 0 : index
    %c0_18 = arith.constant 0 : index
    %41 = vector.load %arg2[%c0_17, %c0_18] : memref<2x32xf32, #tpu.memory_space<vmem>>, vector<2x32xf32>
    %cst_19 = arith.constant dense<0.000000e+00> : vector<2x96xf32>
    %42 = tpu.matmul %41, %1, %cst_19 {dimension_numbers = #tpu.dot_dimension_numbers<[1], [0], [0], [1], [0, 0, 1, 1], [], []>} : vector<2x32xf32>, vector<32x96xf32>, vector<2x96xf32> -> vector<2x96xf32>
    %43 = vector.extract_strided_slice %12 {offsets = [0, 0], sizes = [2, 32], strides = [1, 1]} : vector<2x96xf32> to vector<2x32xf32>
    %44 = vector.extract_strided_slice %42 {offsets = [0, 0], sizes = [2, 32], strides = [1, 1]} : vector<2x96xf32> to vector<2x32xf32>
    %45 = arith.addf %43, %44 : vector<2x32xf32>
    %46 = arith.negf %45 : vector<2x32xf32>
    %47 = math.exp %46 : vector<2x32xf32>
    %cst_20 = arith.constant 1.000000e+00 : f32
    %48 = vector.broadcast %cst_20 : f32 to vector<2x32xf32>
    %49 = arith.addf %48, %47 : vector<2x32xf32>
    %50 = arith.divf %48, %49 : vector<2x32xf32>
    %51 = vector.extract_strided_slice %12 {offsets = [0, 32], sizes = [2, 32], strides = [1, 1]} : vector<2x96xf32> to vector<2x32xf32>
    %52 = vector.extract_strided_slice %42 {offsets = [0, 32], sizes = [2, 32], strides = [1, 1]} : vector<2x96xf32> to vector<2x32xf32>
    %53 = arith.addf %51, %52 : vector<2x32xf32>
    %54 = arith.negf %53 : vector<2x32xf32>
    %55 = math.exp %54 : vector<2x32xf32>
    %cst_21 = arith.constant 1.000000e+00 : f32
    %56 = vector.broadcast %cst_21 : f32 to vector<2x32xf32>
    %57 = arith.addf %56, %55 : vector<2x32xf32>
    %58 = arith.divf %56, %57 : vector<2x32xf32>
    %59 = vector.extract_strided_slice %12 {offsets = [0, 64], sizes = [2, 32], strides = [1, 1]} : vector<2x96xf32> to vector<2x32xf32>
    %60 = vector.extract_strided_slice %42 {offsets = [0, 64], sizes = [2, 32], strides = [1, 1]} : vector<2x96xf32> to vector<2x32xf32>
    %61 = arith.addf %60, %7 : vector<2x32xf32>
    %62 = arith.mulf %50, %61 : vector<2x32xf32>
    %63 = arith.addf %59, %62 : vector<2x32xf32>
    %64 = math.tanh %63 : vector<2x32xf32>
    %cst_22 = arith.constant 1.000000e+00 : f32
    %65 = vector.broadcast %cst_22 : f32 to vector<2x32xf32>
    %66 = arith.subf %65, %58 : vector<2x32xf32>
    %67 = arith.mulf %66, %64 : vector<2x32xf32>
    %68 = arith.mulf %58, %41 : vector<2x32xf32>
    %69 = arith.addf %67, %68 : vector<2x32xf32>
    %cst_23 = arith.constant dense<0.000000e+00> : vector<2x96xf32>
    %70 = tpu.matmul %69, %1, %cst_23 {dimension_numbers = #tpu.dot_dimension_numbers<[1], [0], [0], [1], [0, 0, 1, 1], [], []>} : vector<2x32xf32>, vector<32x96xf32>, vector<2x96xf32> -> vector<2x96xf32>
    %71 = vector.extract_strided_slice %16 {offsets = [0, 0], sizes = [2, 32], strides = [1, 1]} : vector<2x96xf32> to vector<2x32xf32>
    %72 = vector.extract_strided_slice %70 {offsets = [0, 0], sizes = [2, 32], strides = [1, 1]} : vector<2x96xf32> to vector<2x32xf32>
    %73 = arith.addf %71, %72 : vector<2x32xf32>
    %74 = arith.negf %73 : vector<2x32xf32>
    %75 = math.exp %74 : vector<2x32xf32>
    %cst_24 = arith.constant 1.000000e+00 : f32
    %76 = vector.broadcast %cst_24 : f32 to vector<2x32xf32>
    %77 = arith.addf %76, %75 : vector<2x32xf32>
    %78 = arith.divf %76, %77 : vector<2x32xf32>
    %79 = vector.extract_strided_slice %16 {offsets = [0, 32], sizes = [2, 32], strides = [1, 1]} : vector<2x96xf32> to vector<2x32xf32>
    %80 = vector.extract_strided_slice %70 {offsets = [0, 32], sizes = [2, 32], strides = [1, 1]} : vector<2x96xf32> to vector<2x32xf32>
    %81 = arith.addf %79, %80 : vector<2x32xf32>
    %82 = arith.negf %81 : vector<2x32xf32>
    %83 = math.exp %82 : vector<2x32xf32>
    %cst_25 = arith.constant 1.000000e+00 : f32
    %84 = vector.broadcast %cst_25 : f32 to vector<2x32xf32>
    %85 = arith.addf %84, %83 : vector<2x32xf32>
    %86 = arith.divf %84, %85 : vector<2x32xf32>
    %87 = vector.extract_strided_slice %16 {offsets = [0, 64], sizes = [2, 32], strides = [1, 1]} : vector<2x96xf32> to vector<2x32xf32>
    %88 = vector.extract_strided_slice %70 {offsets = [0, 64], sizes = [2, 32], strides = [1, 1]} : vector<2x96xf32> to vector<2x32xf32>
    %89 = arith.addf %88, %7 : vector<2x32xf32>
    %90 = arith.mulf %78, %89 : vector<2x32xf32>
    %91 = arith.addf %87, %90 : vector<2x32xf32>
    %92 = math.tanh %91 : vector<2x32xf32>
    %cst_26 = arith.constant 1.000000e+00 : f32
    %93 = vector.broadcast %cst_26 : f32 to vector<2x32xf32>
    %94 = arith.subf %93, %86 : vector<2x32xf32>
    %95 = arith.mulf %94, %92 : vector<2x32xf32>
    %96 = arith.mulf %86, %69 : vector<2x32xf32>
    %97 = arith.addf %95, %96 : vector<2x32xf32>
    %cst_27 = arith.constant dense<0.000000e+00> : vector<2x96xf32>
    %98 = tpu.matmul %97, %1, %cst_27 {dimension_numbers = #tpu.dot_dimension_numbers<[1], [0], [0], [1], [0, 0, 1, 1], [], []>} : vector<2x32xf32>, vector<32x96xf32>, vector<2x96xf32> -> vector<2x96xf32>
    %99 = vector.extract_strided_slice %20 {offsets = [0, 0], sizes = [2, 32], strides = [1, 1]} : vector<2x96xf32> to vector<2x32xf32>
    %100 = vector.extract_strided_slice %98 {offsets = [0, 0], sizes = [2, 32], strides = [1, 1]} : vector<2x96xf32> to vector<2x32xf32>
    %101 = arith.addf %99, %100 : vector<2x32xf32>
    %102 = arith.negf %101 : vector<2x32xf32>
    %103 = math.exp %102 : vector<2x32xf32>
    %cst_28 = arith.constant 1.000000e+00 : f32
    %104 = vector.broadcast %cst_28 : f32 to vector<2x32xf32>
    %105 = arith.addf %104, %103 : vector<2x32xf32>
    %106 = arith.divf %104, %105 : vector<2x32xf32>
    %107 = vector.extract_strided_slice %20 {offsets = [0, 32], sizes = [2, 32], strides = [1, 1]} : vector<2x96xf32> to vector<2x32xf32>
    %108 = vector.extract_strided_slice %98 {offsets = [0, 32], sizes = [2, 32], strides = [1, 1]} : vector<2x96xf32> to vector<2x32xf32>
    %109 = arith.addf %107, %108 : vector<2x32xf32>
    %110 = arith.negf %109 : vector<2x32xf32>
    %111 = math.exp %110 : vector<2x32xf32>
    %cst_29 = arith.constant 1.000000e+00 : f32
    %112 = vector.broadcast %cst_29 : f32 to vector<2x32xf32>
    %113 = arith.addf %112, %111 : vector<2x32xf32>
    %114 = arith.divf %112, %113 : vector<2x32xf32>
    %115 = vector.extract_strided_slice %20 {offsets = [0, 64], sizes = [2, 32], strides = [1, 1]} : vector<2x96xf32> to vector<2x32xf32>
    %116 = vector.extract_strided_slice %98 {offsets = [0, 64], sizes = [2, 32], strides = [1, 1]} : vector<2x96xf32> to vector<2x32xf32>
    %117 = arith.addf %116, %7 : vector<2x32xf32>
    %118 = arith.mulf %106, %117 : vector<2x32xf32>
    %119 = arith.addf %115, %118 : vector<2x32xf32>
    %120 = math.tanh %119 : vector<2x32xf32>
    %cst_30 = arith.constant 1.000000e+00 : f32
    %121 = vector.broadcast %cst_30 : f32 to vector<2x32xf32>
    %122 = arith.subf %121, %114 : vector<2x32xf32>
    %123 = arith.mulf %122, %120 : vector<2x32xf32>
    %124 = arith.mulf %114, %97 : vector<2x32xf32>
    %125 = arith.addf %123, %124 : vector<2x32xf32>
    %cst_31 = arith.constant dense<0.000000e+00> : vector<2x96xf32>
    %126 = tpu.matmul %125, %1, %cst_31 {dimension_numbers = #tpu.dot_dimension_numbers<[1], [0], [0], [1], [0, 0, 1, 1], [], []>} : vector<2x32xf32>, vector<32x96xf32>, vector<2x96xf32> -> vector<2x96xf32>
    %127 = vector.extract_strided_slice %24 {offsets = [0, 0], sizes = [2, 32], strides = [1, 1]} : vector<2x96xf32> to vector<2x32xf32>
    %128 = vector.extract_strided_slice %126 {offsets = [0, 0], sizes = [2, 32], strides = [1, 1]} : vector<2x96xf32> to vector<2x32xf32>
    %129 = arith.addf %127, %128 : vector<2x32xf32>
    %130 = arith.negf %129 : vector<2x32xf32>
    %131 = math.exp %130 : vector<2x32xf32>
    %cst_32 = arith.constant 1.000000e+00 : f32
    %132 = vector.broadcast %cst_32 : f32 to vector<2x32xf32>
    %133 = arith.addf %132, %131 : vector<2x32xf32>
    %134 = arith.divf %132, %133 : vector<2x32xf32>
    %135 = vector.extract_strided_slice %24 {offsets = [0, 32], sizes = [2, 32], strides = [1, 1]} : vector<2x96xf32> to vector<2x32xf32>
    %136 = vector.extract_strided_slice %126 {offsets = [0, 32], sizes = [2, 32], strides = [1, 1]} : vector<2x96xf32> to vector<2x32xf32>
    %137 = arith.addf %135, %136 : vector<2x32xf32>
    %138 = arith.negf %137 : vector<2x32xf32>
    %139 = math.exp %138 : vector<2x32xf32>
    %cst_33 = arith.constant 1.000000e+00 : f32
    %140 = vector.broadcast %cst_33 : f32 to vector<2x32xf32>
    %141 = arith.addf %140, %139 : vector<2x32xf32>
    %142 = arith.divf %140, %141 : vector<2x32xf32>
    %143 = vector.extract_strided_slice %24 {offsets = [0, 64], sizes = [2, 32], strides = [1, 1]} : vector<2x96xf32> to vector<2x32xf32>
    %144 = vector.extract_strided_slice %126 {offsets = [0, 64], sizes = [2, 32], strides = [1, 1]} : vector<2x96xf32> to vector<2x32xf32>
    %145 = arith.addf %144, %7 : vector<2x32xf32>
    %146 = arith.mulf %134, %145 : vector<2x32xf32>
    %147 = arith.addf %143, %146 : vector<2x32xf32>
    %148 = math.tanh %147 : vector<2x32xf32>
    %cst_34 = arith.constant 1.000000e+00 : f32
    %149 = vector.broadcast %cst_34 : f32 to vector<2x32xf32>
    %150 = arith.subf %149, %142 : vector<2x32xf32>
    %151 = arith.mulf %150, %148 : vector<2x32xf32>
    %152 = arith.mulf %142, %125 : vector<2x32xf32>
    %153 = arith.addf %151, %152 : vector<2x32xf32>
    %cst_35 = arith.constant dense<0.000000e+00> : vector<2x96xf32>
    %154 = tpu.matmul %153, %1, %cst_35 {dimension_numbers = #tpu.dot_dimension_numbers<[1], [0], [0], [1], [0, 0, 1, 1], [], []>} : vector<2x32xf32>, vector<32x96xf32>, vector<2x96xf32> -> vector<2x96xf32>
    %155 = vector.extract_strided_slice %28 {offsets = [0, 0], sizes = [2, 32], strides = [1, 1]} : vector<2x96xf32> to vector<2x32xf32>
    %156 = vector.extract_strided_slice %154 {offsets = [0, 0], sizes = [2, 32], strides = [1, 1]} : vector<2x96xf32> to vector<2x32xf32>
    %157 = arith.addf %155, %156 : vector<2x32xf32>
    %158 = arith.negf %157 : vector<2x32xf32>
    %159 = math.exp %158 : vector<2x32xf32>
    %cst_36 = arith.constant 1.000000e+00 : f32
    %160 = vector.broadcast %cst_36 : f32 to vector<2x32xf32>
    %161 = arith.addf %160, %159 : vector<2x32xf32>
    %162 = arith.divf %160, %161 : vector<2x32xf32>
    %163 = vector.extract_strided_slice %28 {offsets = [0, 32], sizes = [2, 32], strides = [1, 1]} : vector<2x96xf32> to vector<2x32xf32>
    %164 = vector.extract_strided_slice %154 {offsets = [0, 32], sizes = [2, 32], strides = [1, 1]} : vector<2x96xf32> to vector<2x32xf32>
    %165 = arith.addf %163, %164 : vector<2x32xf32>
    %166 = arith.negf %165 : vector<2x32xf32>
    %167 = math.exp %166 : vector<2x32xf32>
    %cst_37 = arith.constant 1.000000e+00 : f32
    %168 = vector.broadcast %cst_37 : f32 to vector<2x32xf32>
    %169 = arith.addf %168, %167 : vector<2x32xf32>
    %170 = arith.divf %168, %169 : vector<2x32xf32>
    %171 = vector.extract_strided_slice %28 {offsets = [0, 64], sizes = [2, 32], strides = [1, 1]} : vector<2x96xf32> to vector<2x32xf32>
    %172 = vector.extract_strided_slice %154 {offsets = [0, 64], sizes = [2, 32], strides = [1, 1]} : vector<2x96xf32> to vector<2x32xf32>
    %173 = arith.addf %172, %7 : vector<2x32xf32>
    %174 = arith.mulf %162, %173 : vector<2x32xf32>
    %175 = arith.addf %171, %174 : vector<2x32xf32>
    %176 = math.tanh %175 : vector<2x32xf32>
    %cst_38 = arith.constant 1.000000e+00 : f32
    %177 = vector.broadcast %cst_38 : f32 to vector<2x32xf32>
    %178 = arith.subf %177, %170 : vector<2x32xf32>
    %179 = arith.mulf %178, %176 : vector<2x32xf32>
    %180 = arith.mulf %170, %153 : vector<2x32xf32>
    %181 = arith.addf %179, %180 : vector<2x32xf32>
    %cst_39 = arith.constant dense<0.000000e+00> : vector<2x96xf32>
    %182 = tpu.matmul %181, %1, %cst_39 {dimension_numbers = #tpu.dot_dimension_numbers<[1], [0], [0], [1], [0, 0, 1, 1], [], []>} : vector<2x32xf32>, vector<32x96xf32>, vector<2x96xf32> -> vector<2x96xf32>
    %183 = vector.extract_strided_slice %32 {offsets = [0, 0], sizes = [2, 32], strides = [1, 1]} : vector<2x96xf32> to vector<2x32xf32>
    %184 = vector.extract_strided_slice %182 {offsets = [0, 0], sizes = [2, 32], strides = [1, 1]} : vector<2x96xf32> to vector<2x32xf32>
    %185 = arith.addf %183, %184 : vector<2x32xf32>
    %186 = arith.negf %185 : vector<2x32xf32>
    %187 = math.exp %186 : vector<2x32xf32>
    %cst_40 = arith.constant 1.000000e+00 : f32
    %188 = vector.broadcast %cst_40 : f32 to vector<2x32xf32>
    %189 = arith.addf %188, %187 : vector<2x32xf32>
    %190 = arith.divf %188, %189 : vector<2x32xf32>
    %191 = vector.extract_strided_slice %32 {offsets = [0, 32], sizes = [2, 32], strides = [1, 1]} : vector<2x96xf32> to vector<2x32xf32>
    %192 = vector.extract_strided_slice %182 {offsets = [0, 32], sizes = [2, 32], strides = [1, 1]} : vector<2x96xf32> to vector<2x32xf32>
    %193 = arith.addf %191, %192 : vector<2x32xf32>
    %194 = arith.negf %193 : vector<2x32xf32>
    %195 = math.exp %194 : vector<2x32xf32>
    %cst_41 = arith.constant 1.000000e+00 : f32
    %196 = vector.broadcast %cst_41 : f32 to vector<2x32xf32>
    %197 = arith.addf %196, %195 : vector<2x32xf32>
    %198 = arith.divf %196, %197 : vector<2x32xf32>
    %199 = vector.extract_strided_slice %32 {offsets = [0, 64], sizes = [2, 32], strides = [1, 1]} : vector<2x96xf32> to vector<2x32xf32>
    %200 = vector.extract_strided_slice %182 {offsets = [0, 64], sizes = [2, 32], strides = [1, 1]} : vector<2x96xf32> to vector<2x32xf32>
    %201 = arith.addf %200, %7 : vector<2x32xf32>
    %202 = arith.mulf %190, %201 : vector<2x32xf32>
    %203 = arith.addf %199, %202 : vector<2x32xf32>
    %204 = math.tanh %203 : vector<2x32xf32>
    %cst_42 = arith.constant 1.000000e+00 : f32
    %205 = vector.broadcast %cst_42 : f32 to vector<2x32xf32>
    %206 = arith.subf %205, %198 : vector<2x32xf32>
    %207 = arith.mulf %206, %204 : vector<2x32xf32>
    %208 = arith.mulf %198, %181 : vector<2x32xf32>
    %209 = arith.addf %207, %208 : vector<2x32xf32>
    %cst_43 = arith.constant dense<0.000000e+00> : vector<2x96xf32>
    %210 = tpu.matmul %209, %1, %cst_43 {dimension_numbers = #tpu.dot_dimension_numbers<[1], [0], [0], [1], [0, 0, 1, 1], [], []>} : vector<2x32xf32>, vector<32x96xf32>, vector<2x96xf32> -> vector<2x96xf32>
    %211 = vector.extract_strided_slice %36 {offsets = [0, 0], sizes = [2, 32], strides = [1, 1]} : vector<2x96xf32> to vector<2x32xf32>
    %212 = vector.extract_strided_slice %210 {offsets = [0, 0], sizes = [2, 32], strides = [1, 1]} : vector<2x96xf32> to vector<2x32xf32>
    %213 = arith.addf %211, %212 : vector<2x32xf32>
    %214 = arith.negf %213 : vector<2x32xf32>
    %215 = math.exp %214 : vector<2x32xf32>
    %cst_44 = arith.constant 1.000000e+00 : f32
    %216 = vector.broadcast %cst_44 : f32 to vector<2x32xf32>
    %217 = arith.addf %216, %215 : vector<2x32xf32>
    %218 = arith.divf %216, %217 : vector<2x32xf32>
    %219 = vector.extract_strided_slice %36 {offsets = [0, 32], sizes = [2, 32], strides = [1, 1]} : vector<2x96xf32> to vector<2x32xf32>
    %220 = vector.extract_strided_slice %210 {offsets = [0, 32], sizes = [2, 32], strides = [1, 1]} : vector<2x96xf32> to vector<2x32xf32>
    %221 = arith.addf %219, %220 : vector<2x32xf32>
    %222 = arith.negf %221 : vector<2x32xf32>
    %223 = math.exp %222 : vector<2x32xf32>
    %cst_45 = arith.constant 1.000000e+00 : f32
    %224 = vector.broadcast %cst_45 : f32 to vector<2x32xf32>
    %225 = arith.addf %224, %223 : vector<2x32xf32>
    %226 = arith.divf %224, %225 : vector<2x32xf32>
    %227 = vector.extract_strided_slice %36 {offsets = [0, 64], sizes = [2, 32], strides = [1, 1]} : vector<2x96xf32> to vector<2x32xf32>
    %228 = vector.extract_strided_slice %210 {offsets = [0, 64], sizes = [2, 32], strides = [1, 1]} : vector<2x96xf32> to vector<2x32xf32>
    %229 = arith.addf %228, %7 : vector<2x32xf32>
    %230 = arith.mulf %218, %229 : vector<2x32xf32>
    %231 = arith.addf %227, %230 : vector<2x32xf32>
    %232 = math.tanh %231 : vector<2x32xf32>
    %cst_46 = arith.constant 1.000000e+00 : f32
    %233 = vector.broadcast %cst_46 : f32 to vector<2x32xf32>
    %234 = arith.subf %233, %226 : vector<2x32xf32>
    %235 = arith.mulf %234, %232 : vector<2x32xf32>
    %236 = arith.mulf %226, %209 : vector<2x32xf32>
    %237 = arith.addf %235, %236 : vector<2x32xf32>
    %cst_47 = arith.constant dense<0.000000e+00> : vector<2x96xf32>
    %238 = tpu.matmul %237, %1, %cst_47 {dimension_numbers = #tpu.dot_dimension_numbers<[1], [0], [0], [1], [0, 0, 1, 1], [], []>} : vector<2x32xf32>, vector<32x96xf32>, vector<2x96xf32> -> vector<2x96xf32>
    %239 = vector.extract_strided_slice %40 {offsets = [0, 0], sizes = [2, 32], strides = [1, 1]} : vector<2x96xf32> to vector<2x32xf32>
    %240 = vector.extract_strided_slice %238 {offsets = [0, 0], sizes = [2, 32], strides = [1, 1]} : vector<2x96xf32> to vector<2x32xf32>
    %241 = arith.addf %239, %240 : vector<2x32xf32>
    %242 = arith.negf %241 : vector<2x32xf32>
    %243 = math.exp %242 : vector<2x32xf32>
    %cst_48 = arith.constant 1.000000e+00 : f32
    %244 = vector.broadcast %cst_48 : f32 to vector<2x32xf32>
    %245 = arith.addf %244, %243 : vector<2x32xf32>
    %246 = arith.divf %244, %245 : vector<2x32xf32>
    %247 = vector.extract_strided_slice %40 {offsets = [0, 32], sizes = [2, 32], strides = [1, 1]} : vector<2x96xf32> to vector<2x32xf32>
    %248 = vector.extract_strided_slice %238 {offsets = [0, 32], sizes = [2, 32], strides = [1, 1]} : vector<2x96xf32> to vector<2x32xf32>
    %249 = arith.addf %247, %248 : vector<2x32xf32>
    %250 = arith.negf %249 : vector<2x32xf32>
    %251 = math.exp %250 : vector<2x32xf32>
    %cst_49 = arith.constant 1.000000e+00 : f32
    %252 = vector.broadcast %cst_49 : f32 to vector<2x32xf32>
    %253 = arith.addf %252, %251 : vector<2x32xf32>
    %254 = arith.divf %252, %253 : vector<2x32xf32>
    %255 = vector.extract_strided_slice %40 {offsets = [0, 64], sizes = [2, 32], strides = [1, 1]} : vector<2x96xf32> to vector<2x32xf32>
    %256 = vector.extract_strided_slice %238 {offsets = [0, 64], sizes = [2, 32], strides = [1, 1]} : vector<2x96xf32> to vector<2x32xf32>
    %257 = arith.addf %256, %7 : vector<2x32xf32>
    %258 = arith.mulf %246, %257 : vector<2x32xf32>
    %259 = arith.addf %255, %258 : vector<2x32xf32>
    %260 = math.tanh %259 : vector<2x32xf32>
    %cst_50 = arith.constant 1.000000e+00 : f32
    %261 = vector.broadcast %cst_50 : f32 to vector<2x32xf32>
    %262 = arith.subf %261, %254 : vector<2x32xf32>
    %263 = arith.mulf %262, %260 : vector<2x32xf32>
    %264 = arith.mulf %254, %237 : vector<2x32xf32>
    %265 = arith.addf %263, %264 : vector<2x32xf32>
    %c0_51 = arith.constant 0 : index
    %c0_52 = arith.constant 0 : index
    %266 = vector.load %arg7[%c0_51, %c0_52] : memref<32x128xf32, #tpu.memory_space<vmem>>, vector<32x128xf32>
    %cst_53 = arith.constant dense<0.000000e+00> : vector<2x128xf32>
    %267 = tpu.matmul %265, %266, %cst_53 {dimension_numbers = #tpu.dot_dimension_numbers<[1], [0], [0], [1], [0, 0, 1, 1], [], []>} : vector<2x32xf32>, vector<32x128xf32>, vector<2x128xf32> -> vector<2x128xf32>
    %c0_54 = arith.constant 0 : index
    %c0_55 = arith.constant 0 : index
    %268 = vector.load %arg8[%c0_54, %c0_55] : memref<1x128xf32, #tpu.memory_space<vmem>>, vector<1x128xf32>
    %269 = vector.broadcast %268 : vector<1x128xf32> to vector<2x128xf32>
    %270 = arith.addf %267, %269 : vector<2x128xf32>
    %c0_56 = arith.constant 0 : index
    %c0_57 = arith.constant 0 : index
    %271 = vector.load %arg9[%c0_56, %c0_57] : memref<2x128xf32, #tpu.memory_space<vmem>>, vector<2x128xf32>
    tpu.vector_store %arg9[%c0_56, %c0_57], %270 {strides = array<i32>} : memref<2x128xf32, #tpu.memory_space<vmem>>, vector<2x128xf32>,
    %272 = arith.negf %265 : vector<2x32xf32>
    %273 = math.exp %272 : vector<2x32xf32>
    %cst_58 = arith.constant 1.000000e+00 : f32
    %274 = vector.broadcast %cst_58 : f32 to vector<2x32xf32>
    %275 = arith.addf %274, %273 : vector<2x32xf32>
    %276 = arith.divf %274, %275 : vector<2x32xf32>
    %c0_59 = arith.constant 0 : index
    %c0_60 = arith.constant 0 : index
    %277 = vector.load %arg10[%c0_59, %c0_60] : memref<2x32xf32, #tpu.memory_space<vmem>>, vector<2x32xf32>
    tpu.vector_store %arg10[%c0_59, %c0_60], %276 {strides = array<i32>} : memref<2x32xf32, #tpu.memory_space<vmem>>, vector<2x32xf32>,
    %c0_61 = arith.constant 0 : index
    %c0_62 = arith.constant 0 : index
    %278 = vector.load %arg11[%c0_61, %c0_62] : memref<2x32xf32, #tpu.memory_space<vmem>>, vector<2x32xf32>
    tpu.vector_store %arg11[%c0_61, %c0_62], %265 {strides = array<i32>} : memref<2x32xf32, #tpu.memory_space<vmem>>, vector<2x32xf32>,
    return
  }
  func.func @transform_0(%arg0: i32) -> (i32, i32, i32) {
    %c0_i32 = arith.constant 0 : i32
    %c0_i32_0 = arith.constant 0 : i32
    %c0_i32_1 = arith.constant 0 : i32
    return %c0_i32, %arg0, %c0_i32_0 : i32, i32, i32
  }
  func.func @transform_1(%arg0: i32) -> (i32, i32) {
    %c0_i32 = arith.constant 0 : i32
    %c0_i32_0 = arith.constant 0 : i32
    return %arg0, %c0_i32 : i32, i32
  }
  func.func @transform_2(%arg0: i32) -> (i32, i32) {
    %c0_i32 = arith.constant 0 : i32
    %c0_i32_0 = arith.constant 0 : i32
    %c0_i32_1 = arith.constant 0 : i32
    return %c0_i32, %c0_i32_0 : i32, i32
  }
  func.func @transform_3(%arg0: i32) -> (i32, i32) {
    %c0_i32 = arith.constant 0 : i32
    %c0_i32_0 = arith.constant 0 : i32
    %c0_i32_1 = arith.constant 0 : i32
    return %c0_i32, %c0_i32_0 : i32, i32
  }
  func.func @transform_4(%arg0: i32) -> (i32, i32) {
    %c0_i32 = arith.constant 0 : i32
    %c0_i32_0 = arith.constant 0 : i32
    %c0_i32_1 = arith.constant 0 : i32
    return %c0_i32, %c0_i32_0 : i32, i32
  }
  func.func @transform_5(%arg0: i32) -> (i32, i32) {
    %c0_i32 = arith.constant 0 : i32
    %c0_i32_0 = arith.constant 0 : i32
    %c0_i32_1 = arith.constant 0 : i32
    return %c0_i32, %c0_i32_0 : i32, i32
  }
  func.func @transform_6(%arg0: i32) -> (i32, i32) {
    %c0_i32 = arith.constant 0 : i32
    %c0_i32_0 = arith.constant 0 : i32
    %c0_i32_1 = arith.constant 0 : i32
    return %c0_i32, %c0_i32_0 : i32, i32
  }
  func.func @transform_7(%arg0: i32) -> (i32, i32) {
    %c0_i32 = arith.constant 0 : i32
    %c0_i32_0 = arith.constant 0 : i32
    %c0_i32_1 = arith.constant 0 : i32
    return %c0_i32, %c0_i32_0 : i32, i32
  }
  func.func @transform_8(%arg0: i32) -> (i32, i32) {
    %c0_i32 = arith.constant 0 : i32
    %c0_i32_0 = arith.constant 0 : i32
    return %arg0, %c0_i32 : i32, i32
  }
  func.func @transform_9(%arg0: i32) -> (i32, i32) {
    %c0_i32 = arith.constant 0 : i32
    %c0_i32_0 = arith.constant 0 : i32
    return %arg0, %c0_i32 : i32, i32
  }
  func.func @transform_10(%arg0: i32) -> (i32, i32) {
    %c0_i32 = arith.constant 0 : i32
    %c0_i32_0 = arith.constant 0 : i32
    return %arg0, %c0_i32 : i32, i32
  }
}

</mosaic_0001>

<llo_original>
// kernel: tpu_custom_call.1
$region0: #{tpu_custom_call.1}
  #allocation0 [shape = 'u32[]', space=smem, size = 0x4, offset = 0x4, fixed_abs, tag = 'smem constant byte address 0x4 - core index']
  #allocation1 [shape = 'u32[144,128]{1,0:T(1,128)}', space=vmem, size = 0x12000, scoped, tag = 'internal scratch']
  %s0 = inlined_call_operand.vmem [shape: f32[8,2,4], index: 0, kind: input, shape index: {}]
  %s1 = inlined_call_operand.vmem [shape: f32[2,32], index: 1, kind: input, shape index: {}]
  %s2 = inlined_call_operand.hbm [shape: f32[4,96], index: 2, kind: input, shape index: {}]
  %s3 = inlined_call_operand.vmem [shape: f32[32,96], index: 3, kind: input, shape index: {}]
  %s4 = inlined_call_operand.vmem [shape: f32[1,96], index: 4, kind: input, shape index: {}]
  %s5 = inlined_call_operand.vmem [shape: f32[1,32], index: 5, kind: input, shape index: {}]
  %s6 = inlined_call_operand.hbm [shape: f32[32,128], index: 6, kind: input, shape index: {}]
  %s7 = inlined_call_operand.vmem [shape: f32[1,128], index: 7, kind: input, shape index: {}]
  %s8 = inlined_call_operand.hbm [shape: f32[2,128], index: 8, kind: output, shape index: {0}]
  %s9 = inlined_call_operand.hbm [shape: f32[2,32], index: 9, kind: output, shape index: {1}]
  %s10 = inlined_call_operand.hbm [shape: f32[2,32], index: 10, kind: output, shape index: {2}]
  %11 = xla_tuple %s8, %s9, %s10
  %s12 = sld [smem:[#allocation0]]
  $region66: #{tpu_custom_call.1} parent=0
    _
  %s14 = ssub.s32 1, %s12
  %s15 = scalar_select 0, %s14, %s12
  $region1: #{tpu_custom_call.1} parent=0
    #allocation2 [shape = 'u8[2048]{0}', space=vmem, size = 0x800, scoped, tag = 'input window, operand 2, single buffered']
    #allocation3 [shape = 's32[1]{0}', space=sflag, size = 0x4, scoped, tag = 'scoped memory for tpu_custom_call.1']
    #allocation4 [shape = 's32[1]{0}', space=sflag, size = 0x4, scoped, tag = 'scoped memory for tpu_custom_call.1']
    #allocation5 [shape = 'u8[16384]{0}', space=vmem, size = 0x4000, scoped, tag = 'input window, operand 6, single buffered']
    #allocation6 [shape = 's32[1]{0}', space=sflag, size = 0x4, scoped, tag = 'scoped memory for tpu_custom_call.1']
    #allocation7 [shape = 'u8[1024]{0}', space=vmem, size = 0x400, scoped, tag = 'output window, operand 0, single buffered']
    #allocation8 [shape = 'u8[1024]{0}', space=vmem, size = 0x400, scoped, tag = 'output window, operand 1, single buffered']
    #allocation9 [shape = 's32[1]{0}', space=sflag, size = 0x4, scoped, tag = 'scoped memory for tpu_custom_call.1']
    #allocation10 [shape = 'u8[1024]{0}', space=vmem, size = 0x400, scoped, tag = 'output window, operand 2, single buffered']
    %16 = vsyncpa [#allocation3], 0
    %17 = vsyncpa [#allocation6], 0
    %18 = vsyncpa [#allocation4], 0
    %19 = vsyncpa [#allocation9], 0
    // Predicated region
    $region2: #{tpu_custom_call.1} parent=1 // pred_check
      _
    $region3: #{tpu_custom_call.1} parent=1 // pred_check_branch
      %21 = sbr.rel (0) target = $region5
    $region4: #{tpu_custom_call.1} parent=1 // pred_region
      _
    $region5: #{tpu_custom_call.1} parent=1 // pred_fallthru
      _
    // Predicated region
    $region6: #{tpu_custom_call.1} parent=1 // pred_check
      _
    $region7: #{tpu_custom_call.1} parent=1 // pred_check_branch
      %23 = sbr.rel (0) target = $region9
    $region8: #{tpu_custom_call.1} parent=1 // pred_region
      _
    $region9: #{tpu_custom_call.1} parent=1 // pred_fallthru
      _
    // Predicated region
    $region10: #{tpu_custom_call.1} parent=1 // pred_check
      _
    $region11: #{tpu_custom_call.1} parent=1 // pred_check_branch
      %25 = sbr.rel (0) target = $region13
    $region12: #{tpu_custom_call.1} parent=1 // pred_region
      %s27 = ssub.s32 64, 64
      %28 = vsyncadd [#allocation3], %s27
      %s30 = sshll.u32 [#allocation2], 4
      %s31 = int_to_ptr.vmem [resolvable:$true] %s30
      %33 = dma.hbm_to_vmem [thread:$0]  %s2, 64, %s31, [#allocation3]
    $region13: #{tpu_custom_call.1} parent=1 // pred_fallthru
      _
    // Predicated region
    $region14: #{tpu_custom_call.1} parent=1 // pred_check
      _
    $region15: #{tpu_custom_call.1} parent=1 // pred_check_branch
      %35 = sbr.rel (0) target = $region17
    $region16: #{tpu_custom_call.1} parent=1 // pred_region
      _
    $region17: #{tpu_custom_call.1} parent=1 // pred_fallthru
      _
    // Predicated region
    $region18: #{tpu_custom_call.1} parent=1 // pred_check
      _
    $region19: #{tpu_custom_call.1} parent=1 // pred_check_branch
      %37 = sbr.rel (0) target = $region21
    $region20: #{tpu_custom_call.1} parent=1 // pred_region
      _
    $region21: #{tpu_custom_call.1} parent=1 // pred_fallthru
      _
    // Predicated region
    $region22: #{tpu_custom_call.1} parent=1 // pred_check
      _
    $region23: #{tpu_custom_call.1} parent=1 // pred_check_branch
      %39 = sbr.rel (0) target = $region25
    $region24: #{tpu_custom_call.1} parent=1 // pred_region
      _
    $region25: #{tpu_custom_call.1} parent=1 // pred_fallthru
      _
    // Predicated region
    $region26: #{tpu_custom_call.1} parent=1 // pred_check
      _
    $region27: #{tpu_custom_call.1} parent=1 // pred_check_branch
      %41 = sbr.rel (0) target = $region29
    $region28: #{tpu_custom_call.1} parent=1 // pred_region
      %s43 = ssub.s32 512, 512
      %44 = vsyncadd [#allocation6], %s43
      %s45 = sshll.u32 [#allocation5], 4
      %s46 = int_to_ptr.vmem [resolvable:$true] %s45
      %51 = dma.hbm_to_vmem [thread:$0]  %s6, 512, %s46, [#allocation6], 128, 128, 8
    $region29: #{tpu_custom_call.1} parent=1 // pred_fallthru
      _
    // Predicated region
    $region30: #{tpu_custom_call.1} parent=1 // pred_check
      _
    $region31: #{tpu_custom_call.1} parent=1 // pred_check_branch
      %53 = sbr.rel (0) target = $region33
    $region32: #{tpu_custom_call.1} parent=1 // pred_region
      _
    $region33: #{tpu_custom_call.1} parent=1 // pred_fallthru
      _
    // Predicated region
    $region34: #{tpu_custom_call.1} parent=1 // pred_check
      _
    $region35: #{tpu_custom_call.1} parent=1 // pred_check_branch
      %55 = sbr.rel (0) target = $region37
    $region36: #{tpu_custom_call.1} parent=1 // pred_region
      %56 = dma.done [#allocation3], 64
    $region37: #{tpu_custom_call.1} parent=1 // pred_fallthru
      _
    // Predicated region
    $region38: #{tpu_custom_call.1} parent=1 // pred_check
      _
    $region39: #{tpu_custom_call.1} parent=1 // pred_check_branch
      %58 = sbr.rel (0) target = $region41
    $region40: #{tpu_custom_call.1} parent=1 // pred_region
      %59 = dma.done [#allocation6], 512
    $region41: #{tpu_custom_call.1} parent=1 // pred_fallthru
      _
    %v60 = vld [vmem:[#allocation2] sm:$0xf]
    %v61 = vld [vmem:[%s3] sm:$0xff]
    %v62 = vld [vmem:[%s3 + $0x8] sm:$0xff]
    %v63 = vld [vmem:[%s3 + $0x10] sm:$0xff]
    %v64 = vld [vmem:[%s3 + $0x18] sm:$0xff]
    %v65 = vld [vmem:[%s4] sm:$0x1]
    %v67 = vlaneseq
    %v68 = vshrl.u32 %v67, 7
    %v69 = vsub.s32 0, %v68
    %v70 = vrot.slane %v65, %v69
    %v72 = vld [vmem:[%s5] sm:$0x1]
    %v74 = vlaneseq
    %v75 = vshrl.u32 %v74, 7
    %v76 = vsub.s32 0, %v75
    %v77 = vrot.slane %v72, %v76
    %v78 = vld [vmem:[%s0] sm:$0x3]
    %v79 = vld [vmem:[%s0 + $0x2] sm:$0x3]
    %v80 = vld [vmem:[%s0 + $0x4] sm:$0x3]
    %v81 = vld [vmem:[%s0 + $0x6] sm:$0x3]
    %v82 = vld [vmem:[%s0 + $0x8] sm:$0x3]
    %v83 = vld [vmem:[%s0 + $0xa] sm:$0x3]
    %v84 = vld [vmem:[%s0 + $0xc] sm:$0x3]
    %v85 = vld [vmem:[%s0 + $0xe] sm:$0x3]
    %vm86 = vcmask 31744
    %v88 = vsel %vm86, %v78, 0
    %vm90 = vcmask 1043456
    %v92 = vsel %vm90, %v60, 0
    %94 = vmatprep.subr.mxu0 0.0
    %95 = vmatpush1.msra.mxu0 %v92
    %96 = vmatprep.subr.mxu0 0.0
    %97 = vmatpush1.msra.mxu0 0.0
    %98 = vmatprep.subr.mxu0 0.0
    %99 = vmatpush1.msra.mxu0 0.0
    %100 = vmatprep.subr.mxu0 0.0
    %101 = vmatpush1.msra.mxu0 0.0
    %102 = vmatprep.subr.mxu0 0.0
    %103 = vmatpush1.msra.mxu0 0.0
    %104 = vmatprep.subr.mxu0 0.0
    %105 = vmatpush1.msra.mxu0 0.0
    %106 = vmatprep.subr.mxu0 0.0
    %107 = vmatpush1.msra.mxu0 0.0
    %108 = vmatprep.subr.mxu0 0.0
    %109 = vmatpush1.msra.mxu0 0.0
    %110 = vmatprep.subr.mxu0 0.0
    %111 = vmatpush1.msra.mxu0 0.0
    %112 = vmatprep.subr.mxu0 0.0
    %113 = vmatpush1.msra.mxu0 0.0
    %114 = vmatprep.subr.mxu0 0.0
    %115 = vmatpush1.msra.mxu0 0.0
    %116 = vmatprep.subr.mxu0 0.0
    %117 = vmatpush1.msra.mxu0 0.0
    %118 = vmatprep.subr.mxu0 0.0
    %119 = vmatpush1.msra.mxu0 0.0
    %120 = vmatprep.subr.mxu0 0.0
    %121 = vmatpush1.msra.mxu0 0.0
    %122 = vmatprep.subr.mxu0 0.0
    %123 = vmatpush1.msra.mxu0 0.0
    %124 = vmatprep.subr.mxu0 0.0
    %125 = vmatpush1.msra.mxu0 0.0
    %126 = vmatprep.subr.mxu0 0.0
    %127 = vmatpush1.msra.mxu0 0.0
    %128 = vmatprep.subr.mxu0 0.0
    %129 = vmatpush1.msra.mxu0 0.0
    %130 = vmatprep.subr.mxu0 0.0
    %131 = vmatpush1.msra.mxu0 0.0
    %132 = vmatprep.subr.mxu0 0.0
    %133 = vmatpush1.msra.mxu0 0.0
    %134 = vmatprep.subr.mxu0 0.0
    %135 = vmatpush1.msra.mxu0 0.0
    %136 = vmatprep.subr.mxu0 0.0
    %137 = vmatpush1.msra.mxu0 0.0
    %138 = vmatprep.subr.mxu0 0.0
    %139 = vmatpush1.msra.mxu0 0.0
    %140 = vmatprep.subr.mxu0 0.0
    %141 = vmatpush1.msra.mxu0 0.0
    %142 = vmatprep.subr.mxu0 0.0
    %143 = vmatpush1.msra.mxu0 0.0
    %144 = vmatprep.subr.mxu0 0.0
    %145 = vmatpush1.msra.mxu0 0.0
    %146 = vmatprep.subr.mxu0 0.0
    %147 = vmatpush1.msra.mxu0 0.0
    %148 = vmatprep.subr.mxu0 0.0
    %149 = vmatpush1.msra.mxu0 0.0
    %150 = vmatprep.subr.mxu0 0.0
    %151 = vmatpush1.msra.mxu0 0.0
    %152 = vmatprep.subr.mxu0 0.0
    %153 = vmatpush1.msra.mxu0 0.0
    %154 = vmatprep.subr.mxu0 0.0
    %155 = vmatpush1.msra.mxu0 0.0
    %156 = vmatprep.subr.mxu0 0.0
    %157 = vmatpush1.msra.mxu0 0.0
    %158 = vmatprep.mubr.f32.mxu0 0.0
    %159 = vmatmul.mubr.f32.gmra.mrb[0].mxu0 %v88
    %v160 = vpop.f32.mrb[0].mxu0
    %v161 = vadd.f32 %v70, %v160
    %v162 = vpop.f32.mrb[0].mxu0
    %163 = vdwg.mxu0
    %v165 = vsel %vm86, %v79, 0
    %167 = vmatprep.subr.mxu0 0.0
    %168 = vmatpush1.msra.mxu0 %v92
    %169 = vmatprep.subr.mxu0 0.0
    %170 = vmatpush1.msra.mxu0 0.0
    %171 = vmatprep.subr.mxu0 0.0
    %172 = vmatpush1.msra.mxu0 0.0
    %173 = vmatprep.subr.mxu0 0.0
    %174 = vmatpush1.msra.mxu0 0.0
    %175 = vmatprep.subr.mxu0 0.0
    %176 = vmatpush1.msra.mxu0 0.0
    %177 = vmatprep.subr.mxu0 0.0
    %178 = vmatpush1.msra.mxu0 0.0
    %179 = vmatprep.subr.mxu0 0.0
    %180 = vmatpush1.msra.mxu0 0.0
    %181 = vmatprep.subr.mxu0 0.0
    %182 = vmatpush1.msra.mxu0 0.0
    %183 = vmatprep.subr.mxu0 0.0
    %184 = vmatpush1.msra.mxu0 0.0
    %185 = vmatprep.subr.mxu0 0.0
    %186 = vmatpush1.msra.mxu0 0.0
    %187 = vmatprep.subr.mxu0 0.0
    %188 = vmatpush1.msra.mxu0 0.0
    %189 = vmatprep.subr.mxu0 0.0
    %190 = vmatpush1.msra.mxu0 0.0
    %191 = vmatprep.subr.mxu0 0.0
    %192 = vmatpush1.msra.mxu0 0.0
    %193 = vmatprep.subr.mxu0 0.0
    %194 = vmatpush1.msra.mxu0 0.0
    %195 = vmatprep.subr.mxu0 0.0
    %196 = vmatpush1.msra.mxu0 0.0
    %197 = vmatprep.subr.mxu0 0.0
    %198 = vmatpush1.msra.mxu0 0.0
    %199 = vmatprep.subr.mxu0 0.0
    %200 = vmatpush1.msra.mxu0 0.0
    %201 = vmatprep.subr.mxu0 0.0
    %202 = vmatpush1.msra.mxu0 0.0
    %203 = vmatprep.subr.mxu0 0.0
    %204 = vmatpush1.msra.mxu0 0.0
    %205 = vmatprep.subr.mxu0 0.0
    %206 = vmatpush1.msra.mxu0 0.0
    %207 = vmatprep.subr.mxu0 0.0
    %208 = vmatpush1.msra.mxu0 0.0
    %209 = vmatprep.subr.mxu0 0.0
    %210 = vmatpush1.msra.mxu0 0.0
    %211 = vmatprep.subr.mxu0 0.0
    %212 = vmatpush1.msra.mxu0 0.0
    %213 = vmatprep.subr.mxu0 0.0
    %214 = vmatpush1.msra.mxu0 0.0
    %215 = vmatprep.subr.mxu0 0.0
    %216 = vmatpush1.msra.mxu0 0.0
    %217 = vmatprep.subr.mxu0 0.0
    %218 = vmatpush1.msra.mxu0 0.0
    %219 = vmatprep.subr.mxu0 0.0
    %220 = vmatpush1.msra.mxu0 0.0
    %221 = vmatprep.subr.mxu0 0.0
    %222 = vmatpush1.msra.mxu0 0.0
    %223 = vmatprep.subr.mxu0 0.0
    %224 = vmatpush1.msra.mxu0 0.0
    %225 = vmatprep.subr.mxu0 0.0
    %226 = vmatpush1.msra.mxu0 0.0
    %227 = vmatprep.subr.mxu0 0.0
    %228 = vmatpush1.msra.mxu0 0.0
    %229 = vmatprep.subr.mxu0 0.0
    %230 = vmatpush1.msra.mxu0 0.0
    %231 = vmatprep.mubr.f32.mxu0 0.0
    %232 = vmatmul.mubr.f32.gmra.mrb[0].mxu0 %v165
    %v233 = vpop.f32.mrb[0].mxu0
    %v234 = vadd.f32 %v70, %v233
    %v235 = vpop.f32.mrb[0].mxu0
    %236 = vdwg.mxu0
    %v238 = vsel %vm86, %v80, 0
    %240 = vmatprep.subr.mxu0 0.0
    %241 = vmatpush1.msra.mxu0 %v92
    %242 = vmatprep.subr.mxu0 0.0
    %243 = vmatpush1.msra.mxu0 0.0
    %244 = vmatprep.subr.mxu0 0.0
    %245 = vmatpush1.msra.mxu0 0.0
    %246 = vmatprep.subr.mxu0 0.0
    %247 = vmatpush1.msra.mxu0 0.0
    %248 = vmatprep.subr.mxu0 0.0
    %249 = vmatpush1.msra.mxu0 0.0
    %250 = vmatprep.subr.mxu0 0.0
    %251 = vmatpush1.msra.mxu0 0.0
    %252 = vmatprep.subr.mxu0 0.0
    %253 = vmatpush1.msra.mxu0 0.0
    %254 = vmatprep.subr.mxu0 0.0
    %255 = vmatpush1.msra.mxu0 0.0
    %256 = vmatprep.subr.mxu0 0.0
    %257 = vmatpush1.msra.mxu0 0.0
    %258 = vmatprep.subr.mxu0 0.0
    %259 = vmatpush1.msra.mxu0 0.0
    %260 = vmatprep.subr.mxu0 0.0
    %261 = vmatpush1.msra.mxu0 0.0
    %262 = vmatprep.subr.mxu0 0.0
    %263 = vmatpush1.msra.mxu0 0.0
    %264 = vmatprep.subr.mxu0 0.0
    %265 = vmatpush1.msra.mxu0 0.0
    %266 = vmatprep.subr.mxu0 0.0
    %267 = vmatpush1.msra.mxu0 0.0
    %268 = vmatprep.subr.mxu0 0.0
    %269 = vmatpush1.msra.mxu0 0.0
    %270 = vmatprep.subr.mxu0 0.0
    %271 = vmatpush1.msra.mxu0 0.0
    %272 = vmatprep.subr.mxu0 0.0
    %273 = vmatpush1.msra.mxu0 0.0
    %274 = vmatprep.subr.mxu0 0.0
    %275 = vmatpush1.msra.mxu0 0.0
    %276 = vmatprep.subr.mxu0 0.0
    %277 = vmatpush1.msra.mxu0 0.0
    %278 = vmatprep.subr.mxu0 0.0
    %279 = vmatpush1.msra.mxu0 0.0
    %280 = vmatprep.subr.mxu0 0.0
    %281 = vmatpush1.msra.mxu0 0.0
    %282 = vmatprep.subr.mxu0 0.0
    %283 = vmatpush1.msra.mxu0 0.0
    %284 = vmatprep.subr.mxu0 0.0
    %285 = vmatpush1.msra.mxu0 0.0
    %286 = vmatprep.subr.mxu0 0.0
    %287 = vmatpush1.msra.mxu0 0.0
    %288 = vmatprep.subr.mxu0 0.0
    %289 = vmatpush1.msra.mxu0 0.0
    %290 = vmatprep.subr.mxu0 0.0
    %291 = vmatpush1.msra.mxu0 0.0
    %292 = vmatprep.subr.mxu0 0.0
    %293 = vmatpush1.msra.mxu0 0.0
    %294 = vmatprep.subr.mxu0 0.0
    %295 = vmatpush1.msra.mxu0 0.0
    %296 = vmatprep.subr.mxu0 0.0
    %297 = vmatpush1.msra.mxu0 0.0
    %298 = vmatprep.subr.mxu0 0.0
    %299 = vmatpush1.msra.mxu0 0.0
    %300 = vmatprep.subr.mxu0 0.0
    %301 = vmatpush1.msra.mxu0 0.0
    %302 = vmatprep.subr.mxu0 0.0
    %303 = vmatpush1.msra.mxu0 0.0
    %304 = vmatprep.mubr.f32.mxu0 0.0
    %305 = vmatmul.mubr.f32.gmra.mrb[0].mxu0 %v238
    %v306 = vpop.f32.mrb[0].mxu0
    %v307 = vadd.f32 %v70, %v306
    %v308 = vpop.f32.mrb[0].mxu0
    %309 = vdwg.mxu0
    %v311 = vsel %vm86, %v81, 0
    %313 = vmatprep.subr.mxu0 0.0
    %314 = vmatpush1.msra.mxu0 %v92
    %315 = vmatprep.subr.mxu0 0.0
    %316 = vmatpush1.msra.mxu0 0.0
    %317 = vmatprep.subr.mxu0 0.0
    %318 = vmatpush1.msra.mxu0 0.0
    %319 = vmatprep.subr.mxu0 0.0
    %320 = vmatpush1.msra.mxu0 0.0
    %321 = vmatprep.subr.mxu0 0.0
    %322 = vmatpush1.msra.mxu0 0.0
    %323 = vmatprep.subr.mxu0 0.0
    %324 = vmatpush1.msra.mxu0 0.0
    %325 = vmatprep.subr.mxu0 0.0
    %326 = vmatpush1.msra.mxu0 0.0
    %327 = vmatprep.subr.mxu0 0.0
    %328 = vmatpush1.msra.mxu0 0.0
    %329 = vmatprep.subr.mxu0 0.0
    %330 = vmatpush1.msra.mxu0 0.0
    %331 = vmatprep.subr.mxu0 0.0
    %332 = vmatpush1.msra.mxu0 0.0
    %333 = vmatprep.subr.mxu0 0.0
    %334 = vmatpush1.msra.mxu0 0.0
    %335 = vmatprep.subr.mxu0 0.0
    %336 = vmatpush1.msra.mxu0 0.0
    %337 = vmatprep.subr.mxu0 0.0
    %338 = vmatpush1.msra.mxu0 0.0
    %339 = vmatprep.subr.mxu0 0.0
    %340 = vmatpush1.msra.mxu0 0.0
    %341 = vmatprep.subr.mxu0 0.0
    %342 = vmatpush1.msra.mxu0 0.0
    %343 = vmatprep.subr.mxu0 0.0
    %344 = vmatpush1.msra.mxu0 0.0
    %345 = vmatprep.subr.mxu0 0.0
    %346 = vmatpush1.msra.mxu0 0.0
    %347 = vmatprep.subr.mxu0 0.0
    %348 = vmatpush1.msra.mxu0 0.0
    %349 = vmatprep.subr.mxu0 0.0
    %350 = vmatpush1.msra.mxu0 0.0
    %351 = vmatprep.subr.mxu0 0.0
    %352 = vmatpush1.msra.mxu0 0.0
    %353 = vmatprep.subr.mxu0 0.0
    %354 = vmatpush1.msra.mxu0 0.0
    %355 = vmatprep.subr.mxu0 0.0
    %356 = vmatpush1.msra.mxu0 0.0
    %357 = vmatprep.subr.mxu0 0.0
    %358 = vmatpush1.msra.mxu0 0.0
    %359 = vmatprep.subr.mxu0 0.0
    %360 = vmatpush1.msra.mxu0 0.0
    %361 = vmatprep.subr.mxu0 0.0
    %362 = vmatpush1.msra.mxu0 0.0
    %363 = vmatprep.subr.mxu0 0.0
    %364 = vmatpush1.msra.mxu0 0.0
    %365 = vmatprep.subr.mxu0 0.0
    %366 = vmatpush1.msra.mxu0 0.0
    %367 = vmatprep.subr.mxu0 0.0
    %368 = vmatpush1.msra.mxu0 0.0
    %369 = vmatprep.subr.mxu0 0.0
    %370 = vmatpush1.msra.mxu0 0.0
    %371 = vmatprep.subr.mxu0 0.0
    %372 = vmatpush1.msra.mxu0 0.0
    %373 = vmatprep.subr.mxu0 0.0
    %374 = vmatpush1.msra.mxu0 0.0
    %375 = vmatprep.subr.mxu0 0.0
    %376 = vmatpush1.msra.mxu0 0.0
    %377 = vmatprep.mubr.f32.mxu0 0.0
    %378 = vmatmul.mubr.f32.gmra.mrb[0].mxu0 %v311
    %v379 = vpop.f32.mrb[0].mxu0
    %v380 = vadd.f32 %v70, %v379
    %v381 = vpop.f32.mrb[0].mxu0
    %382 = vdwg.mxu0
    %v384 = vsel %vm86, %v82, 0
    %386 = vmatprep.subr.mxu0 0.0
    %387 = vmatpush1.msra.mxu0 %v92
    %388 = vmatprep.subr.mxu0 0.0
    %389 = vmatpush1.msra.mxu0 0.0
    %390 = vmatprep.subr.mxu0 0.0
    %391 = vmatpush1.msra.mxu0 0.0
    %392 = vmatprep.subr.mxu0 0.0
    %393 = vmatpush1.msra.mxu0 0.0
    %394 = vmatprep.subr.mxu0 0.0
    %395 = vmatpush1.msra.mxu0 0.0
    %396 = vmatprep.subr.mxu0 0.0
    %397 = vmatpush1.msra.mxu0 0.0
    %398 = vmatprep.subr.mxu0 0.0
    %399 = vmatpush1.msra.mxu0 0.0
    %400 = vmatprep.subr.mxu0 0.0
    %401 = vmatpush1.msra.mxu0 0.0
    %402 = vmatprep.subr.mxu0 0.0
    %403 = vmatpush1.msra.mxu0 0.0
    %404 = vmatprep.subr.mxu0 0.0
    %405 = vmatpush1.msra.mxu0 0.0
    %406 = vmatprep.subr.mxu0 0.0
    %407 = vmatpush1.msra.mxu0 0.0
    %408 = vmatprep.subr.mxu0 0.0
    %409 = vmatpush1.msra.mxu0 0.0
    %410 = vmatprep.subr.mxu0 0.0
    %411 = vmatpush1.msra.mxu0 0.0
    %412 = vmatprep.subr.mxu0 0.0
    %413 = vmatpush1.msra.mxu0 0.0
    %414 = vmatprep.subr.mxu0 0.0
    %415 = vmatpush1.msra.mxu0 0.0
    %416 = vmatprep.subr.mxu0 0.0
    %417 = vmatpush1.msra.mxu0 0.0
    %418 = vmatprep.subr.mxu0 0.0
    %419 = vmatpush1.msra.mxu0 0.0
    %420 = vmatprep.subr.mxu0 0.0
    %421 = vmatpush1.msra.mxu0 0.0
    %422 = vmatprep.subr.mxu0 0.0
    %423 = vmatpush1.msra.mxu0 0.0
    %424 = vmatprep.subr.mxu0 0.0
    %425 = vmatpush1.msra.mxu0 0.0
    %426 = vmatprep.subr.mxu0 0.0
    %427 = vmatpush1.msra.mxu0 0.0
    %428 = vmatprep.subr.mxu0 0.0
    %429 = vmatpush1.msra.mxu0 0.0
    %430 = vmatprep.subr.mxu0 0.0
    %431 = vmatpush1.msra.mxu0 0.0
    %432 = vmatprep.subr.mxu0 0.0
    %433 = vmatpush1.msra.mxu0 0.0
    %434 = vmatprep.subr.mxu0 0.0
    %435 = vmatpush1.msra.mxu0 0.0
    %436 = vmatprep.subr.mxu0 0.0
    %437 = vmatpush1.msra.mxu0 0.0
    %438 = vmatprep.subr.mxu0 0.0
    %439 = vmatpush1.msra.mxu0 0.0
    %440 = vmatprep.subr.mxu0 0.0
    %441 = vmatpush1.msra.mxu0 0.0
    %442 = vmatprep.subr.mxu0 0.0
    %443 = vmatpush1.msra.mxu0 0.0
    %444 = vmatprep.subr.mxu0 0.0
    %445 = vmatpush1.msra.mxu0 0.0
    %446 = vmatprep.subr.mxu0 0.0
    %447 = vmatpush1.msra.mxu0 0.0
    %448 = vmatprep.subr.mxu0 0.0
    %449 = vmatpush1.msra.mxu0 0.0
    %450 = vmatprep.mubr.f32.mxu0 0.0
    %451 = vmatmul.mubr.f32.gmra.mrb[0].mxu0 %v384
    %v452 = vpop.f32.mrb[0].mxu0
    %v453 = vadd.f32 %v70, %v452
    %v454 = vpop.f32.mrb[0].mxu0
    %455 = vdwg.mxu0
    %v457 = vsel %vm86, %v83, 0
    %459 = vmatprep.subr.mxu0 0.0
    %460 = vmatpush1.msra.mxu0 %v92
    %461 = vmatprep.subr.mxu0 0.0
    %462 = vmatpush1.msra.mxu0 0.0
    %463 = vmatprep.subr.mxu0 0.0
    %464 = vmatpush1.msra.mxu0 0.0
    %465 = vmatprep.subr.mxu0 0.0
    %466 = vmatpush1.msra.mxu0 0.0
    %467 = vmatprep.subr.mxu0 0.0
    %468 = vmatpush1.msra.mxu0 0.0
    %469 = vmatprep.subr.mxu0 0.0
    %470 = vmatpush1.msra.mxu0 0.0
    %471 = vmatprep.subr.mxu0 0.0
    %472 = vmatpush1.msra.mxu0 0.0
    %473 = vmatprep.subr.mxu0 0.0
    %474 = vmatpush1.msra.mxu0 0.0
    %475 = vmatprep.subr.mxu0 0.0
    %476 = vmatpush1.msra.mxu0 0.0
    %477 = vmatprep.subr.mxu0 0.0
    %478 = vmatpush1.msra.mxu0 0.0
    %479 = vmatprep.subr.mxu0 0.0
    %480 = vmatpush1.msra.mxu0 0.0
    %481 = vmatprep.subr.mxu0 0.0
    %482 = vmatpush1.msra.mxu0 0.0
    %483 = vmatprep.subr.mxu0 0.0
    %484 = vmatpush1.msra.mxu0 0.0
    %485 = vmatprep.subr.mxu0 0.0
    %486 = vmatpush1.msra.mxu0 0.0
    %487 = vmatprep.subr.mxu0 0.0
    %488 = vmatpush1.msra.mxu0 0.0
    %489 = vmatprep.subr.mxu0 0.0
    %490 = vmatpush1.msra.mxu0 0.0
    %491 = vmatprep.subr.mxu0 0.0
    %492 = vmatpush1.msra.mxu0 0.0
    %493 = vmatprep.subr.mxu0 0.0
    %494 = vmatpush1.msra.mxu0 0.0
    %495 = vmatprep.subr.mxu0 0.0
    %496 = vmatpush1.msra.mxu0 0.0
    %497 = vmatprep.subr.mxu0 0.0
    %498 = vmatpush1.msra.mxu0 0.0
    %499 = vmatprep.subr.mxu0 0.0
    %500 = vmatpush1.msra.mxu0 0.0
    %501 = vmatprep.subr.mxu0 0.0
    %502 = vmatpush1.msra.mxu0 0.0
    %503 = vmatprep.subr.mxu0 0.0
    %504 = vmatpush1.msra.mxu0 0.0
    %505 = vmatprep.subr.mxu0 0.0
    %506 = vmatpush1.msra.mxu0 0.0
    %507 = vmatprep.subr.mxu0 0.0
    %508 = vmatpush1.msra.mxu0 0.0
    %509 = vmatprep.subr.mxu0 0.0
    %510 = vmatpush1.msra.mxu0 0.0
    %511 = vmatprep.subr.mxu0 0.0
    %512 = vmatpush1.msra.mxu0 0.0
    %513 = vmatprep.subr.mxu0 0.0
    %514 = vmatpush1.msra.mxu0 0.0
    %515 = vmatprep.subr.mxu0 0.0
    %516 = vmatpush1.msra.mxu0 0.0
    %517 = vmatprep.subr.mxu0 0.0
    %518 = vmatpush1.msra.mxu0 0.0
    %519 = vmatprep.subr.mxu0 0.0
    %520 = vmatpush1.msra.mxu0 0.0
    %521 = vmatprep.subr.mxu0 0.0
    %522 = vmatpush1.msra.mxu0 0.0
    %523 = vmatprep.mubr.f32.mxu0 0.0
    %524 = vmatmul.mubr.f32.gmra.mrb[0].mxu0 %v457
    %v525 = vpop.f32.mrb[0].mxu0
    %v526 = vadd.f32 %v70, %v525
    %v527 = vpop.f32.mrb[0].mxu0
    %528 = vdwg.mxu0
    %v530 = vsel %vm86, %v84, 0
    %532 = vmatprep.subr.mxu0 0.0
    %533 = vmatpush1.msra.mxu0 %v92
    %534 = vmatprep.subr.mxu0 0.0
    %535 = vmatpush1.msra.mxu0 0.0
    %536 = vmatprep.subr.mxu0 0.0
    %537 = vmatpush1.msra.mxu0 0.0
    %538 = vmatprep.subr.mxu0 0.0
    %539 = vmatpush1.msra.mxu0 0.0
    %540 = vmatprep.subr.mxu0 0.0
    %541 = vmatpush1.msra.mxu0 0.0
    %542 = vmatprep.subr.mxu0 0.0
    %543 = vmatpush1.msra.mxu0 0.0
    %544 = vmatprep.subr.mxu0 0.0
    %545 = vmatpush1.msra.mxu0 0.0
    %546 = vmatprep.subr.mxu0 0.0
    %547 = vmatpush1.msra.mxu0 0.0
    %548 = vmatprep.subr.mxu0 0.0
    %549 = vmatpush1.msra.mxu0 0.0
    %550 = vmatprep.subr.mxu0 0.0
    %551 = vmatpush1.msra.mxu0 0.0
    %552 = vmatprep.subr.mxu0 0.0
    %553 = vmatpush1.msra.mxu0 0.0
    %554 = vmatprep.subr.mxu0 0.0
    %555 = vmatpush1.msra.mxu0 0.0
    %556 = vmatprep.subr.mxu0 0.0
    %557 = vmatpush1.msra.mxu0 0.0
    %558 = vmatprep.subr.mxu0 0.0
    %559 = vmatpush1.msra.mxu0 0.0
    %560 = vmatprep.subr.mxu0 0.0
    %561 = vmatpush1.msra.mxu0 0.0
    %562 = vmatprep.subr.mxu0 0.0
    %563 = vmatpush1.msra.mxu0 0.0
    %564 = vmatprep.subr.mxu0 0.0
    %565 = vmatpush1.msra.mxu0 0.0
    %566 = vmatprep.subr.mxu0 0.0
    %567 = vmatpush1.msra.mxu0 0.0
    %568 = vmatprep.subr.mxu0 0.0
    %569 = vmatpush1.msra.mxu0 0.0
    %570 = vmatprep.subr.mxu0 0.0
    %571 = vmatpush1.msra.mxu0 0.0
    %572 = vmatprep.subr.mxu0 0.0
    %573 = vmatpush1.msra.mxu0 0.0
    %574 = vmatprep.subr.mxu0 0.0
    %575 = vmatpush1.msra.mxu0 0.0
    %576 = vmatprep.subr.mxu0 0.0
    %577 = vmatpush1.msra.mxu0 0.0
    %578 = vmatprep.subr.mxu0 0.0
    %579 = vmatpush1.msra.mxu0 0.0
    %580 = vmatprep.subr.mxu0 0.0
    %581 = vmatpush1.msra.mxu0 0.0
    %582 = vmatprep.subr.mxu0 0.0
    %583 = vmatpush1.msra.mxu0 0.0
    %584 = vmatprep.subr.mxu0 0.0
    %585 = vmatpush1.msra.mxu0 0.0
    %586 = vmatprep.subr.mxu0 0.0
    %587 = vmatpush1.msra.mxu0 0.0
    %588 = vmatprep.subr.mxu0 0.0
    %589 = vmatpush1.msra.mxu0 0.0
    %590 = vmatprep.subr.mxu0 0.0
    %591 = vmatpush1.msra.mxu0 0.0
    %592 = vmatprep.subr.mxu0 0.0
    %593 = vmatpush1.msra.mxu0 0.0
    %594 = vmatprep.subr.mxu0 0.0
    %595 = vmatpush1.msra.mxu0 0.0
    %596 = vmatprep.mubr.f32.mxu0 0.0
    %597 = vmatmul.mubr.f32.gmra.mrb[0].mxu0 %v530
    %v598 = vpop.f32.mrb[0].mxu0
    %v599 = vadd.f32 %v70, %v598
    %v600 = vpop.f32.mrb[0].mxu0
    %601 = vdwg.mxu0
    %v603 = vsel %vm86, %v85, 0
    %605 = vmatprep.subr.mxu0 0.0
    %606 = vmatpush1.msra.mxu0 %v92
    %607 = vmatprep.subr.mxu0 0.0
    %608 = vmatpush1.msra.mxu0 0.0
    %609 = vmatprep.subr.mxu0 0.0
    %610 = vmatpush1.msra.mxu0 0.0
    %611 = vmatprep.subr.mxu0 0.0
    %612 = vmatpush1.msra.mxu0 0.0
    %613 = vmatprep.subr.mxu0 0.0
    %614 = vmatpush1.msra.mxu0 0.0
    %615 = vmatprep.subr.mxu0 0.0
    %616 = vmatpush1.msra.mxu0 0.0
    %617 = vmatprep.subr.mxu0 0.0
    %618 = vmatpush1.msra.mxu0 0.0
    %619 = vmatprep.subr.mxu0 0.0
    %620 = vmatpush1.msra.mxu0 0.0
    %621 = vmatprep.subr.mxu0 0.0
    %622 = vmatpush1.msra.mxu0 0.0
    %623 = vmatprep.subr.mxu0 0.0
    %624 = vmatpush1.msra.mxu0 0.0
    %625 = vmatprep.subr.mxu0 0.0
    %626 = vmatpush1.msra.mxu0 0.0
    %627 = vmatprep.subr.mxu0 0.0
    %628 = vmatpush1.msra.mxu0 0.0
    %629 = vmatprep.subr.mxu0 0.0
    %630 = vmatpush1.msra.mxu0 0.0
    %631 = vmatprep.subr.mxu0 0.0
    %632 = vmatpush1.msra.mxu0 0.0
    %633 = vmatprep.subr.mxu0 0.0
    %634 = vmatpush1.msra.mxu0 0.0
    %635 = vmatprep.subr.mxu0 0.0
    %636 = vmatpush1.msra.mxu0 0.0
    %637 = vmatprep.subr.mxu0 0.0
    %638 = vmatpush1.msra.mxu0 0.0
    %639 = vmatprep.subr.mxu0 0.0
    %640 = vmatpush1.msra.mxu0 0.0
    %641 = vmatprep.subr.mxu0 0.0
    %642 = vmatpush1.msra.mxu0 0.0
    %643 = vmatprep.subr.mxu0 0.0
    %644 = vmatpush1.msra.mxu0 0.0
    %645 = vmatprep.subr.mxu0 0.0
    %646 = vmatpush1.msra.mxu0 0.0
    %647 = vmatprep.subr.mxu0 0.0
    %648 = vmatpush1.msra.mxu0 0.0
    %649 = vmatprep.subr.mxu0 0.0
    %650 = vmatpush1.msra.mxu0 0.0
    %651 = vmatprep.subr.mxu0 0.0
    %652 = vmatpush1.msra.mxu0 0.0
    %653 = vmatprep.subr.mxu0 0.0
    %654 = vmatpush1.msra.mxu0 0.0
    %655 = vmatprep.subr.mxu0 0.0
    %656 = vmatpush1.msra.mxu0 0.0
    %657 = vmatprep.subr.mxu0 0.0
    %658 = vmatpush1.msra.mxu0 0.0
    %659 = vmatprep.subr.mxu0 0.0
    %660 = vmatpush1.msra.mxu0 0.0
    %661 = vmatprep.subr.mxu0 0.0
    %662 = vmatpush1.msra.mxu0 0.0
    %663 = vmatprep.subr.mxu0 0.0
    %664 = vmatpush1.msra.mxu0 0.0
    %665 = vmatprep.subr.mxu0 0.0
    %666 = vmatpush1.msra.mxu0 0.0
    %667 = vmatprep.subr.mxu0 0.0
    %668 = vmatpush1.msra.mxu0 0.0
    %669 = vmatprep.mubr.f32.mxu0 0.0
    %670 = vmatmul.mubr.f32.gmra.mrb[0].mxu0 %v603
    %v671 = vpop.f32.mrb[0].mxu0
    %v672 = vadd.f32 %v70, %v671
    %v673 = vpop.f32.mrb[0].mxu0
    %674 = vdwg.mxu0
    %v675 = vld [vmem:[%s1] sm:$0x3]
    %vm676 = vcmask 261120
    %v678 = vsel %vm676, %v675, 0
    %680 = vmatprep.subr.mxu0 0.0
    %681 = vmatpush1.msra.mxu0 %v61
    %682 = vmatprep.subr.mxu0 0.0
    %683 = vmatpush1.msra.mxu0 %v62
    %684 = vmatprep.subr.mxu0 0.0
    %685 = vmatpush1.msra.mxu0 %v63
    %686 = vmatprep.subr.mxu0 0.0
    %687 = vmatpush1.msra.mxu0 %v64
    %688 = vmatprep.subr.mxu0 0.0
    %689 = vmatpush1.msra.mxu0 0.0
    %690 = vmatprep.subr.mxu0 0.0
    %691 = vmatpush1.msra.mxu0 0.0
    %692 = vmatprep.subr.mxu0 0.0
    %693 = vmatpush1.msra.mxu0 0.0
    %694 = vmatprep.subr.mxu0 0.0
    %695 = vmatpush1.msra.mxu0 0.0
    %696 = vmatprep.subr.mxu0 0.0
    %697 = vmatpush1.msra.mxu0 0.0
    %698 = vmatprep.subr.mxu0 0.0
    %699 = vmatpush1.msra.mxu0 0.0
    %700 = vmatprep.subr.mxu0 0.0
    %701 = vmatpush1.msra.mxu0 0.0
    %702 = vmatprep.subr.mxu0 0.0
    %703 = vmatpush1.msra.mxu0 0.0
    %704 = vmatprep.subr.mxu0 0.0
    %705 = vmatpush1.msra.mxu0 0.0
    %706 = vmatprep.subr.mxu0 0.0
    %707 = vmatpush1.msra.mxu0 0.0
    %708 = vmatprep.subr.mxu0 0.0
    %709 = vmatpush1.msra.mxu0 0.0
    %710 = vmatprep.subr.mxu0 0.0
    %711 = vmatpush1.msra.mxu0 0.0
    %712 = vmatprep.subr.mxu0 0.0
    %713 = vmatpush1.msra.mxu0 0.0
    %714 = vmatprep.subr.mxu0 0.0
    %715 = vmatpush1.msra.mxu0 0.0
    %716 = vmatprep.subr.mxu0 0.0
    %717 = vmatpush1.msra.mxu0 0.0
    %718 = vmatprep.subr.mxu0 0.0
    %719 = vmatpush1.msra.mxu0 0.0
    %720 = vmatprep.subr.mxu0 0.0
    %721 = vmatpush1.msra.mxu0 0.0
    %722 = vmatprep.subr.mxu0 0.0
    %723 = vmatpush1.msra.mxu0 0.0
    %724 = vmatprep.subr.mxu0 0.0
    %725 = vmatpush1.msra.mxu0 0.0
    %726 = vmatprep.subr.mxu0 0.0
    %727 = vmatpush1.msra.mxu0 0.0
    %728 = vmatprep.subr.mxu0 0.0
    %729 = vmatpush1.msra.mxu0 0.0
    %730 = vmatprep.subr.mxu0 0.0
    %731 = vmatpush1.msra.mxu0 0.0
    %732 = vmatprep.subr.mxu0 0.0
    %733 = vmatpush1.msra.mxu0 0.0
    %734 = vmatprep.subr.mxu0 0.0
    %735 = vmatpush1.msra.mxu0 0.0
    %736 = vmatprep.subr.mxu0 0.0
    %737 = vmatpush1.msra.mxu0 0.0
    %738 = vmatprep.subr.mxu0 0.0
    %739 = vmatpush1.msra.mxu0 0.0
    %740 = vmatprep.subr.mxu0 0.0
    %741 = vmatpush1.msra.mxu0 0.0
    %742 = vmatprep.subr.mxu0 0.0
    %743 = vmatpush1.msra.mxu0 0.0
    %744 = vmatprep.mubr.f32.mxu0 0.0
    %745 = vmatmul.mubr.f32.gmra.mrb[0].mxu0 %v678
    %v746 = vpop.f32.mrb[0].mxu0
    %v747 = vadd.f32 0.0, %v746
    %v748 = vpop.f32.mrb[0].mxu0
    %749 = vdwg.mxu0
    %v750 = vadd.f32 %v161, %v747
    %v751 = vxor.u32 %v750, 2147483648
    %v752 = vmul.f32 %v751, 1.442695
    %v753 = vpow.pop %v752
    %v754 = vadd.f32 %v753, 1.0
    %v755 = vrcp.pop %v754
    %v756 = vmul.f32 1.0, %v755
    %757 = vrot.lane.b32.xlu0 %v77, 64
    %v758 = vpop.permute.xlu0 %757
    %v760 = vadd.f32 %v747, %v758
    %762 = vrot.lane.b32.xlu0 %v760, 64
    %v763 = vpop.permute.xlu0 %762
    %v765 = vmul.f32 %v756, %v763
    %767 = vrot.lane.b32.xlu0 %v765, 64
    %v768 = vpop.permute.xlu0 %767
    %v770 = vadd.f32 %v161, %v768
    %v771 = vtanh.pop %v770
    %v772 = vsub.f32 1.0, %v756
    %774 = vrot.lane.b32.xlu0 %v771, 96
    %v775 = vpop.permute.xlu0 %774
    %v777 = vmul.f32 %v772, %v775
    %778 = vrot.lane.b32.xlu0 %v675, 32
    %v779 = vpop.permute.xlu0 %778
    %v781 = vmul.f32 %v756, %v779
    %v782 = vadd.f32 %v777, %v781
    %784 = vrot.lane.b32.xlu0 %v782, 96
    %v785 = vpop.permute.xlu0 %784
    %v786 = vsel %vm676, %v785, 0
    %788 = vmatprep.subr.mxu0 0.0
    %789 = vmatpush1.msra.mxu0 %v61
    %790 = vmatprep.subr.mxu0 0.0
    %791 = vmatpush1.msra.mxu0 %v62
    %792 = vmatprep.subr.mxu0 0.0
    %793 = vmatpush1.msra.mxu0 %v63
    %794 = vmatprep.subr.mxu0 0.0
    %795 = vmatpush1.msra.mxu0 %v64
    %796 = vmatprep.subr.mxu0 0.0
    %797 = vmatpush1.msra.mxu0 0.0
    %798 = vmatprep.subr.mxu0 0.0
    %799 = vmatpush1.msra.mxu0 0.0
    %800 = vmatprep.subr.mxu0 0.0
    %801 = vmatpush1.msra.mxu0 0.0
    %802 = vmatprep.subr.mxu0 0.0
    %803 = vmatpush1.msra.mxu0 0.0
    %804 = vmatprep.subr.mxu0 0.0
    %805 = vmatpush1.msra.mxu0 0.0
    %806 = vmatprep.subr.mxu0 0.0
    %807 = vmatpush1.msra.mxu0 0.0
    %808 = vmatprep.subr.mxu0 0.0
    %809 = vmatpush1.msra.mxu0 0.0
    %810 = vmatprep.subr.mxu0 0.0
    %811 = vmatpush1.msra.mxu0 0.0
    %812 = vmatprep.subr.mxu0 0.0
    %813 = vmatpush1.msra.mxu0 0.0
    %814 = vmatprep.subr.mxu0 0.0
    %815 = vmatpush1.msra.mxu0 0.0
    %816 = vmatprep.subr.mxu0 0.0
    %817 = vmatpush1.msra.mxu0 0.0
    %818 = vmatprep.subr.mxu0 0.0
    %819 = vmatpush1.msra.mxu0 0.0
    %820 = vmatprep.subr.mxu0 0.0
    %821 = vmatpush1.msra.mxu0 0.0
    %822 = vmatprep.subr.mxu0 0.0
    %823 = vmatpush1.msra.mxu0 0.0
    %824 = vmatprep.subr.mxu0 0.0
    %825 = vmatpush1.msra.mxu0 0.0
    %826 = vmatprep.subr.mxu0 0.0
    %827 = vmatpush1.msra.mxu0 0.0
    %828 = vmatprep.subr.mxu0 0.0
    %829 = vmatpush1.msra.mxu0 0.0
    %830 = vmatprep.subr.mxu0 0.0
    %831 = vmatpush1.msra.mxu0 0.0
    %832 = vmatprep.subr.mxu0 0.0
    %833 = vmatpush1.msra.mxu0 0.0
    %834 = vmatprep.subr.mxu0 0.0
    %835 = vmatpush1.msra.mxu0 0.0
    %836 = vmatprep.subr.mxu0 0.0
    %837 = vmatpush1.msra.mxu0 0.0
    %838 = vmatprep.subr.mxu0 0.0
    %839 = vmatpush1.msra.mxu0 0.0
    %840 = vmatprep.subr.mxu0 0.0
    %841 = vmatpush1.msra.mxu0 0.0
    %842 = vmatprep.subr.mxu0 0.0
    %843 = vmatpush1.msra.mxu0 0.0
    %844 = vmatprep.subr.mxu0 0.0
    %845 = vmatpush1.msra.mxu0 0.0
    %846 = vmatprep.subr.mxu0 0.0
    %847 = vmatpush1.msra.mxu0 0.0
    %848 = vmatprep.subr.mxu0 0.0
    %849 = vmatpush1.msra.mxu0 0.0
    %850 = vmatprep.subr.mxu0 0.0
    %851 = vmatpush1.msra.mxu0 0.0
    %852 = vmatprep.mubr.f32.mxu0 0.0
    %853 = vmatmul.mubr.f32.gmra.mrb[0].mxu0 %v786
    %v854 = vpop.f32.mrb[0].mxu0
    %v855 = vadd.f32 0.0, %v854
    %v856 = vpop.f32.mrb[0].mxu0
    %857 = vdwg.mxu0
    %v858 = vadd.f32 %v234, %v855
    %v859 = vxor.u32 %v858, 2147483648
    %v860 = vmul.f32 %v859, 1.442695
    %v861 = vpow.pop %v860
    %v862 = vadd.f32 %v861, 1.0
    %v863 = vrcp.pop %v862
    %v864 = vmul.f32 1.0, %v863
    %v865 = vadd.f32 %v855, %v758
    %867 = vrot.lane.b32.xlu0 %v865, 64
    %v868 = vpop.permute.xlu0 %867
    %v870 = vmul.f32 %v864, %v868
    %872 = vrot.lane.b32.xlu0 %v870, 64
    %v873 = vpop.permute.xlu0 %872
    %v875 = vadd.f32 %v234, %v873
    %v876 = vtanh.pop %v875
    %v877 = vsub.f32 1.0, %v864
    %879 = vrot.lane.b32.xlu0 %v876, 96
    %v880 = vpop.permute.xlu0 %879
    %v882 = vmul.f32 %v877, %v880
    %v883 = vmul.f32 %v864, %v782
    %v884 = vadd.f32 %v882, %v883
    %886 = vrot.lane.b32.xlu0 %v884, 96
    %v887 = vpop.permute.xlu0 %886
    %v888 = vsel %vm676, %v887, 0
    %890 = vmatprep.subr.mxu0 0.0
    %891 = vmatpush1.msra.mxu0 %v61
    %892 = vmatprep.subr.mxu0 0.0
    %893 = vmatpush1.msra.mxu0 %v62
    %894 = vmatprep.subr.mxu0 0.0
    %895 = vmatpush1.msra.mxu0 %v63
    %896 = vmatprep.subr.mxu0 0.0
    %897 = vmatpush1.msra.mxu0 %v64
    %898 = vmatprep.subr.mxu0 0.0
    %899 = vmatpush1.msra.mxu0 0.0
    %900 = vmatprep.subr.mxu0 0.0
    %901 = vmatpush1.msra.mxu0 0.0
    %902 = vmatprep.subr.mxu0 0.0
    %903 = vmatpush1.msra.mxu0 0.0
    %904 = vmatprep.subr.mxu0 0.0
    %905 = vmatpush1.msra.mxu0 0.0
    %906 = vmatprep.subr.mxu0 0.0
    %907 = vmatpush1.msra.mxu0 0.0
    %908 = vmatprep.subr.mxu0 0.0
    %909 = vmatpush1.msra.mxu0 0.0
    %910 = vmatprep.subr.mxu0 0.0
    %911 = vmatpush1.msra.mxu0 0.0
    %912 = vmatprep.subr.mxu0 0.0
    %913 = vmatpush1.msra.mxu0 0.0
    %914 = vmatprep.subr.mxu0 0.0
    %915 = vmatpush1.msra.mxu0 0.0
    %916 = vmatprep.subr.mxu0 0.0
    %917 = vmatpush1.msra.mxu0 0.0
    %918 = vmatprep.subr.mxu0 0.0
    %919 = vmatpush1.msra.mxu0 0.0
    %920 = vmatprep.subr.mxu0 0.0
    %921 = vmatpush1.msra.mxu0 0.0
    %922 = vmatprep.subr.mxu0 0.0
    %923 = vmatpush1.msra.mxu0 0.0
    %924 = vmatprep.subr.mxu0 0.0
    %925 = vmatpush1.msra.mxu0 0.0
    %926 = vmatprep.subr.mxu0 0.0
    %927 = vmatpush1.msra.mxu0 0.0
    %928 = vmatprep.subr.mxu0 0.0
    %929 = vmatpush1.msra.mxu0 0.0
    %930 = vmatprep.subr.mxu0 0.0
    %931 = vmatpush1.msra.mxu0 0.0
    %932 = vmatprep.subr.mxu0 0.0
    %933 = vmatpush1.msra.mxu0 0.0
    %934 = vmatprep.subr.mxu0 0.0
    %935 = vmatpush1.msra.mxu0 0.0
    %936 = vmatprep.subr.mxu0 0.0
    %937 = vmatpush1.msra.mxu0 0.0
    %938 = vmatprep.subr.mxu0 0.0
    %939 = vmatpush1.msra.mxu0 0.0
    %940 = vmatprep.subr.mxu0 0.0
    %941 = vmatpush1.msra.mxu0 0.0
    %942 = vmatprep.subr.mxu0 0.0
    %943 = vmatpush1.msra.mxu0 0.0
    %944 = vmatprep.subr.mxu0 0.0
    %945 = vmatpush1.msra.mxu0 0.0
    %946 = vmatprep.subr.mxu0 0.0
    %947 = vmatpush1.msra.mxu0 0.0
    %948 = vmatprep.subr.mxu0 0.0
    %949 = vmatpush1.msra.mxu0 0.0
    %950 = vmatprep.subr.mxu0 0.0
    %951 = vmatpush1.msra.mxu0 0.0
    %952 = vmatprep.subr.mxu0 0.0
    %953 = vmatpush1.msra.mxu0 0.0
    %954 = vmatprep.mubr.f32.mxu0 0.0
    %955 = vmatmul.mubr.f32.gmra.mrb[0].mxu0 %v888
    %v956 = vpop.f32.mrb[0].mxu0
    %v957 = vadd.f32 0.0, %v956
    %v958 = vpop.f32.mrb[0].mxu0
    %959 = vdwg.mxu0
    %v960 = vadd.f32 %v307, %v957
    %v961 = vxor.u32 %v960, 2147483648
    %v962 = vmul.f32 %v961, 1.442695
    %v963 = vpow.pop %v962
    %v964 = vadd.f32 %v963, 1.0
    %v965 = vrcp.pop %v964
    %v966 = vmul.f32 1.0, %v965
    %v967 = vadd.f32 %v957, %v758
    %969 = vrot.lane.b32.xlu0 %v967, 64
    %v970 = vpop.permute.xlu0 %969
    %v972 = vmul.f32 %v966, %v970
    %974 = vrot.lane.b32.xlu0 %v972, 64
    %v975 = vpop.permute.xlu0 %974
    %v977 = vadd.f32 %v307, %v975
    %v978 = vtanh.pop %v977
    %v979 = vsub.f32 1.0, %v966
    %981 = vrot.lane.b32.xlu0 %v978, 96
    %v982 = vpop.permute.xlu0 %981
    %v984 = vmul.f32 %v979, %v982
    %v985 = vmul.f32 %v966, %v884
    %v986 = vadd.f32 %v984, %v985
    %988 = vrot.lane.b32.xlu0 %v986, 96
    %v989 = vpop.permute.xlu0 %988
    %v990 = vsel %vm676, %v989, 0
    %992 = vmatprep.subr.mxu0 0.0
    %993 = vmatpush1.msra.mxu0 %v61
    %994 = vmatprep.subr.mxu0 0.0
    %995 = vmatpush1.msra.mxu0 %v62
    %996 = vmatprep.subr.mxu0 0.0
    %997 = vmatpush1.msra.mxu0 %v63
    %998 = vmatprep.subr.mxu0 0.0
    %999 = vmatpush1.msra.mxu0 %v64
    %1000 = vmatprep.subr.mxu0 0.0
    %1001 = vmatpush1.msra.mxu0 0.0
    %1002 = vmatprep.subr.mxu0 0.0
    %1003 = vmatpush1.msra.mxu0 0.0
    %1004 = vmatprep.subr.mxu0 0.0
    %1005 = vmatpush1.msra.mxu0 0.0
    %1006 = vmatprep.subr.mxu0 0.0
    %1007 = vmatpush1.msra.mxu0 0.0
    %1008 = vmatprep.subr.mxu0 0.0
    %1009 = vmatpush1.msra.mxu0 0.0
    %1010 = vmatprep.subr.mxu0 0.0
    %1011 = vmatpush1.msra.mxu0 0.0
    %1012 = vmatprep.subr.mxu0 0.0
    %1013 = vmatpush1.msra.mxu0 0.0
    %1014 = vmatprep.subr.mxu0 0.0
    %1015 = vmatpush1.msra.mxu0 0.0
    %1016 = vmatprep.subr.mxu0 0.0
    %1017 = vmatpush1.msra.mxu0 0.0
    %1018 = vmatprep.subr.mxu0 0.0
    %1019 = vmatpush1.msra.mxu0 0.0
    %1020 = vmatprep.subr.mxu0 0.0
    %1021 = vmatpush1.msra.mxu0 0.0
    %1022 = vmatprep.subr.mxu0 0.0
    %1023 = vmatpush1.msra.mxu0 0.0
    %1024 = vmatprep.subr.mxu0 0.0
    %1025 = vmatpush1.msra.mxu0 0.0
    %1026 = vmatprep.subr.mxu0 0.0
    %1027 = vmatpush1.msra.mxu0 0.0
    %1028 = vmatprep.subr.mxu0 0.0
    %1029 = vmatpush1.msra.mxu0 0.0
    %1030 = vmatprep.subr.mxu0 0.0
    %1031 = vmatpush1.msra.mxu0 0.0
    %1032 = vmatprep.subr.mxu0 0.0
    %1033 = vmatpush1.msra.mxu0 0.0
    %1034 = vmatprep.subr.mxu0 0.0
    %1035 = vmatpush1.msra.mxu0 0.0
    %1036 = vmatprep.subr.mxu0 0.0
    %1037 = vmatpush1.msra.mxu0 0.0
    %1038 = vmatprep.subr.mxu0 0.0
    %1039 = vmatpush1.msra.mxu0 0.0
    %1040 = vmatprep.subr.mxu0 0.0
    %1041 = vmatpush1.msra.mxu0 0.0
    %1042 = vmatprep.subr.mxu0 0.0
    %1043 = vmatpush1.msra.mxu0 0.0
    %1044 = vmatprep.subr.mxu0 0.0
    %1045 = vmatpush1.msra.mxu0 0.0
    %1046 = vmatprep.subr.mxu0 0.0
    %1047 = vmatpush1.msra.mxu0 0.0
    %1048 = vmatprep.subr.mxu0 0.0
    %1049 = vmatpush1.msra.mxu0 0.0
    %1050 = vmatprep.subr.mxu0 0.0
    %1051 = vmatpush1.msra.mxu0 0.0
    %1052 = vmatprep.subr.mxu0 0.0
    %1053 = vmatpush1.msra.mxu0 0.0
    %1054 = vmatprep.subr.mxu0 0.0
    %1055 = vmatpush1.msra.mxu0 0.0
    %1056 = vmatprep.mubr.f32.mxu0 0.0
    %1057 = vmatmul.mubr.f32.gmra.mrb[0].mxu0 %v990
    %v1058 = vpop.f32.mrb[0].mxu0
    %v1059 = vadd.f32 0.0, %v1058
    %v1060 = vpop.f32.mrb[0].mxu0
    %1061 = vdwg.mxu0
    %v1062 = vadd.f32 %v380, %v1059
    %v1063 = vxor.u32 %v1062, 2147483648
    %v1064 = vmul.f32 %v1063, 1.442695
    %v1065 = vpow.pop %v1064
    %v1066 = vadd.f32 %v1065, 1.0
    %v1067 = vrcp.pop %v1066
    %v1068 = vmul.f32 1.0, %v1067
    %v1069 = vadd.f32 %v1059, %v758
    %1071 = vrot.lane.b32.xlu0 %v1069, 64
    %v1072 = vpop.permute.xlu0 %1071
    %v1074 = vmul.f32 %v1068, %v1072
    %1076 = vrot.lane.b32.xlu0 %v1074, 64
    %v1077 = vpop.permute.xlu0 %1076
    %v1079 = vadd.f32 %v380, %v1077
    %v1080 = vtanh.pop %v1079
    %v1081 = vsub.f32 1.0, %v1068
    %1083 = vrot.lane.b32.xlu0 %v1080, 96
    %v1084 = vpop.permute.xlu0 %1083
    %v1086 = vmul.f32 %v1081, %v1084
    %v1087 = vmul.f32 %v1068, %v986
    %v1088 = vadd.f32 %v1086, %v1087
    %1090 = vrot.lane.b32.xlu0 %v1088, 96
    %v1091 = vpop.permute.xlu0 %1090
    %v1092 = vsel %vm676, %v1091, 0
    %1094 = vmatprep.subr.mxu0 0.0
    %1095 = vmatpush1.msra.mxu0 %v61
    %1096 = vmatprep.subr.mxu0 0.0
    %1097 = vmatpush1.msra.mxu0 %v62
    %1098 = vmatprep.subr.mxu0 0.0
    %1099 = vmatpush1.msra.mxu0 %v63
    %1100 = vmatprep.subr.mxu0 0.0
    %1101 = vmatpush1.msra.mxu0 %v64
    %1102 = vmatprep.subr.mxu0 0.0
    %1103 = vmatpush1.msra.mxu0 0.0
    %1104 = vmatprep.subr.mxu0 0.0
    %1105 = vmatpush1.msra.mxu0 0.0
    %1106 = vmatprep.subr.mxu0 0.0
    %1107 = vmatpush1.msra.mxu0 0.0
    %1108 = vmatprep.subr.mxu0 0.0
    %1109 = vmatpush1.msra.mxu0 0.0
    %1110 = vmatprep.subr.mxu0 0.0
    %1111 = vmatpush1.msra.mxu0 0.0
    %1112 = vmatprep.subr.mxu0 0.0
    %1113 = vmatpush1.msra.mxu0 0.0
    %1114 = vmatprep.subr.mxu0 0.0
    %1115 = vmatpush1.msra.mxu0 0.0
    %1116 = vmatprep.subr.mxu0 0.0
    %1117 = vmatpush1.msra.mxu0 0.0
    %1118 = vmatprep.subr.mxu0 0.0
    %1119 = vmatpush1.msra.mxu0 0.0
    %1120 = vmatprep.subr.mxu0 0.0
    %1121 = vmatpush1.msra.mxu0 0.0
    %1122 = vmatprep.subr.mxu0 0.0
    %1123 = vmatpush1.msra.mxu0 0.0
    %1124 = vmatprep.subr.mxu0 0.0
    %1125 = vmatpush1.msra.mxu0 0.0
    %1126 = vmatprep.subr.mxu0 0.0
    %1127 = vmatpush1.msra.mxu0 0.0
    %1128 = vmatprep.subr.mxu0 0.0
    %1129 = vmatpush1.msra.mxu0 0.0
    %1130 = vmatprep.subr.mxu0 0.0
    %1131 = vmatpush1.msra.mxu0 0.0
    %1132 = vmatprep.subr.mxu0 0.0
    %1133 = vmatpush1.msra.mxu0 0.0
    %1134 = vmatprep.subr.mxu0 0.0
    %1135 = vmatpush1.msra.mxu0 0.0
    %1136 = vmatprep.subr.mxu0 0.0
    %1137 = vmatpush1.msra.mxu0 0.0
    %1138 = vmatprep.subr.mxu0 0.0
    %1139 = vmatpush1.msra.mxu0 0.0
    %1140 = vmatprep.subr.mxu0 0.0
    %1141 = vmatpush1.msra.mxu0 0.0
    %1142 = vmatprep.subr.mxu0 0.0
    %1143 = vmatpush1.msra.mxu0 0.0
    %1144 = vmatprep.subr.mxu0 0.0
    %1145 = vmatpush1.msra.mxu0 0.0
    %1146 = vmatprep.subr.mxu0 0.0
    %1147 = vmatpush1.msra.mxu0 0.0
    %1148 = vmatprep.subr.mxu0 0.0
    %1149 = vmatpush1.msra.mxu0 0.0
    %1150 = vmatprep.subr.mxu0 0.0
    %1151 = vmatpush1.msra.mxu0 0.0
    %1152 = vmatprep.subr.mxu0 0.0
    %1153 = vmatpush1.msra.mxu0 0.0
    %1154 = vmatprep.subr.mxu0 0.0
    %1155 = vmatpush1.msra.mxu0 0.0
    %1156 = vmatprep.subr.mxu0 0.0
    %1157 = vmatpush1.msra.mxu0 0.0
    %1158 = vmatprep.mubr.f32.mxu0 0.0
    %1159 = vmatmul.mubr.f32.gmra.mrb[0].mxu0 %v1092
    %v1160 = vpop.f32.mrb[0].mxu0
    %v1161 = vadd.f32 0.0, %v1160
    %v1162 = vpop.f32.mrb[0].mxu0
    %1163 = vdwg.mxu0
    %v1164 = vadd.f32 %v453, %v1161
    %v1165 = vxor.u32 %v1164, 2147483648
    %v1166 = vmul.f32 %v1165, 1.442695
    %v1167 = vpow.pop %v1166
    %v1168 = vadd.f32 %v1167, 1.0
    %v1169 = vrcp.pop %v1168
    %v1170 = vmul.f32 1.0, %v1169
    %v1171 = vadd.f32 %v1161, %v758
    %1173 = vrot.lane.b32.xlu0 %v1171, 64
    %v1174 = vpop.permute.xlu0 %1173
    %v1176 = vmul.f32 %v1170, %v1174
    %1178 = vrot.lane.b32.xlu0 %v1176, 64
    %v1179 = vpop.permute.xlu0 %1178
    %v1181 = vadd.f32 %v453, %v1179
    %v1182 = vtanh.pop %v1181
    %v1183 = vsub.f32 1.0, %v1170
    %1185 = vrot.lane.b32.xlu0 %v1182, 96
    %v1186 = vpop.permute.xlu0 %1185
    %v1188 = vmul.f32 %v1183, %v1186
    %v1189 = vmul.f32 %v1170, %v1088
    %v1190 = vadd.f32 %v1188, %v1189
    %1192 = vrot.lane.b32.xlu0 %v1190, 96
    %v1193 = vpop.permute.xlu0 %1192
    %v1194 = vsel %vm676, %v1193, 0
    %1196 = vmatprep.subr.mxu0 0.0
    %1197 = vmatpush1.msra.mxu0 %v61
    %1198 = vmatprep.subr.mxu0 0.0
    %1199 = vmatpush1.msra.mxu0 %v62
    %1200 = vmatprep.subr.mxu0 0.0
    %1201 = vmatpush1.msra.mxu0 %v63
    %1202 = vmatprep.subr.mxu0 0.0
    %1203 = vmatpush1.msra.mxu0 %v64
    %1204 = vmatprep.subr.mxu0 0.0
    %1205 = vmatpush1.msra.mxu0 0.0
    %1206 = vmatprep.subr.mxu0 0.0
    %1207 = vmatpush1.msra.mxu0 0.0
    %1208 = vmatprep.subr.mxu0 0.0
    %1209 = vmatpush1.msra.mxu0 0.0
    %1210 = vmatprep.subr.mxu0 0.0
    %1211 = vmatpush1.msra.mxu0 0.0
    %1212 = vmatprep.subr.mxu0 0.0
    %1213 = vmatpush1.msra.mxu0 0.0
    %1214 = vmatprep.subr.mxu0 0.0
    %1215 = vmatpush1.msra.mxu0 0.0
    %1216 = vmatprep.subr.mxu0 0.0
    %1217 = vmatpush1.msra.mxu0 0.0
    %1218 = vmatprep.subr.mxu0 0.0
    %1219 = vmatpush1.msra.mxu0 0.0
    %1220 = vmatprep.subr.mxu0 0.0
    %1221 = vmatpush1.msra.mxu0 0.0
    %1222 = vmatprep.subr.mxu0 0.0
    %1223 = vmatpush1.msra.mxu0 0.0
    %1224 = vmatprep.subr.mxu0 0.0
    %1225 = vmatpush1.msra.mxu0 0.0
    %1226 = vmatprep.subr.mxu0 0.0
    %1227 = vmatpush1.msra.mxu0 0.0
    %1228 = vmatprep.subr.mxu0 0.0
    %1229 = vmatpush1.msra.mxu0 0.0
    %1230 = vmatprep.subr.mxu0 0.0
    %1231 = vmatpush1.msra.mxu0 0.0
    %1232 = vmatprep.subr.mxu0 0.0
    %1233 = vmatpush1.msra.mxu0 0.0
    %1234 = vmatprep.subr.mxu0 0.0
    %1235 = vmatpush1.msra.mxu0 0.0
    %1236 = vmatprep.subr.mxu0 0.0
    %1237 = vmatpush1.msra.mxu0 0.0
    %1238 = vmatprep.subr.mxu0 0.0
    %1239 = vmatpush1.msra.mxu0 0.0
    %1240 = vmatprep.subr.mxu0 0.0
    %1241 = vmatpush1.msra.mxu0 0.0
    %1242 = vmatprep.subr.mxu0 0.0
    %1243 = vmatpush1.msra.mxu0 0.0
    %1244 = vmatprep.subr.mxu0 0.0
    %1245 = vmatpush1.msra.mxu0 0.0
    %1246 = vmatprep.subr.mxu0 0.0
    %1247 = vmatpush1.msra.mxu0 0.0
    %1248 = vmatprep.subr.mxu0 0.0
    %1249 = vmatpush1.msra.mxu0 0.0
    %1250 = vmatprep.subr.mxu0 0.0
    %1251 = vmatpush1.msra.mxu0 0.0
    %1252 = vmatprep.subr.mxu0 0.0
    %1253 = vmatpush1.msra.mxu0 0.0
    %1254 = vmatprep.subr.mxu0 0.0
    %1255 = vmatpush1.msra.mxu0 0.0
    %1256 = vmatprep.subr.mxu0 0.0
    %1257 = vmatpush1.msra.mxu0 0.0
    %1258 = vmatprep.subr.mxu0 0.0
    %1259 = vmatpush1.msra.mxu0 0.0
    %1260 = vmatprep.mubr.f32.mxu0 0.0
    %1261 = vmatmul.mubr.f32.gmra.mrb[0].mxu0 %v1194
    %v1262 = vpop.f32.mrb[0].mxu0
    %v1263 = vadd.f32 0.0, %v1262
    %v1264 = vpop.f32.mrb[0].mxu0
    %1265 = vdwg.mxu0
    %v1266 = vadd.f32 %v526, %v1263
    %v1267 = vxor.u32 %v1266, 2147483648
    %v1268 = vmul.f32 %v1267, 1.442695
    %v1269 = vpow.pop %v1268
    %v1270 = vadd.f32 %v1269, 1.0
    %v1271 = vrcp.pop %v1270
    %v1272 = vmul.f32 1.0, %v1271
    %v1273 = vadd.f32 %v1263, %v758
    %1275 = vrot.lane.b32.xlu0 %v1273, 64
    %v1276 = vpop.permute.xlu0 %1275
    %v1278 = vmul.f32 %v1272, %v1276
    %1280 = vrot.lane.b32.xlu0 %v1278, 64
    %v1281 = vpop.permute.xlu0 %1280
    %v1283 = vadd.f32 %v526, %v1281
    %v1284 = vtanh.pop %v1283
    %v1285 = vsub.f32 1.0, %v1272
    %1287 = vrot.lane.b32.xlu0 %v1284, 96
    %v1288 = vpop.permute.xlu0 %1287
    %v1290 = vmul.f32 %v1285, %v1288
    %v1291 = vmul.f32 %v1272, %v1190
    %v1292 = vadd.f32 %v1290, %v1291
    %1294 = vrot.lane.b32.xlu0 %v1292, 96
    %v1295 = vpop.permute.xlu0 %1294
    %v1296 = vsel %vm676, %v1295, 0
    %1298 = vmatprep.subr.mxu0 0.0
    %1299 = vmatpush1.msra.mxu0 %v61
    %1300 = vmatprep.subr.mxu0 0.0
    %1301 = vmatpush1.msra.mxu0 %v62
    %1302 = vmatprep.subr.mxu0 0.0
    %1303 = vmatpush1.msra.mxu0 %v63
    %1304 = vmatprep.subr.mxu0 0.0
    %1305 = vmatpush1.msra.mxu0 %v64
    %1306 = vmatprep.subr.mxu0 0.0
    %1307 = vmatpush1.msra.mxu0 0.0
    %1308 = vmatprep.subr.mxu0 0.0
    %1309 = vmatpush1.msra.mxu0 0.0
    %1310 = vmatprep.subr.mxu0 0.0
    %1311 = vmatpush1.msra.mxu0 0.0
    %1312 = vmatprep.subr.mxu0 0.0
    %1313 = vmatpush1.msra.mxu0 0.0
    %1314 = vmatprep.subr.mxu0 0.0
    %1315 = vmatpush1.msra.mxu0 0.0
    %1316 = vmatprep.subr.mxu0 0.0
    %1317 = vmatpush1.msra.mxu0 0.0
    %1318 = vmatprep.subr.mxu0 0.0
    %1319 = vmatpush1.msra.mxu0 0.0
    %1320 = vmatprep.subr.mxu0 0.0
    %1321 = vmatpush1.msra.mxu0 0.0
    %1322 = vmatprep.subr.mxu0 0.0
    %1323 = vmatpush1.msra.mxu0 0.0
    %1324 = vmatprep.subr.mxu0 0.0
    %1325 = vmatpush1.msra.mxu0 0.0
    %1326 = vmatprep.subr.mxu0 0.0
    %1327 = vmatpush1.msra.mxu0 0.0
    %1328 = vmatprep.subr.mxu0 0.0
    %1329 = vmatpush1.msra.mxu0 0.0
    %1330 = vmatprep.subr.mxu0 0.0
    %1331 = vmatpush1.msra.mxu0 0.0
    %1332 = vmatprep.subr.mxu0 0.0
    %1333 = vmatpush1.msra.mxu0 0.0
    %1334 = vmatprep.subr.mxu0 0.0
    %1335 = vmatpush1.msra.mxu0 0.0
    %1336 = vmatprep.subr.mxu0 0.0
    %1337 = vmatpush1.msra.mxu0 0.0
    %1338 = vmatprep.subr.mxu0 0.0
    %1339 = vmatpush1.msra.mxu0 0.0
    %1340 = vmatprep.subr.mxu0 0.0
    %1341 = vmatpush1.msra.mxu0 0.0
    %1342 = vmatprep.subr.mxu0 0.0
    %1343 = vmatpush1.msra.mxu0 0.0
    %1344 = vmatprep.subr.mxu0 0.0
    %1345 = vmatpush1.msra.mxu0 0.0
    %1346 = vmatprep.subr.mxu0 0.0
    %1347 = vmatpush1.msra.mxu0 0.0
    %1348 = vmatprep.subr.mxu0 0.0
    %1349 = vmatpush1.msra.mxu0 0.0
    %1350 = vmatprep.subr.mxu0 0.0
    %1351 = vmatpush1.msra.mxu0 0.0
    %1352 = vmatprep.subr.mxu0 0.0
    %1353 = vmatpush1.msra.mxu0 0.0
    %1354 = vmatprep.subr.mxu0 0.0
    %1355 = vmatpush1.msra.mxu0 0.0
    %1356 = vmatprep.subr.mxu0 0.0
    %1357 = vmatpush1.msra.mxu0 0.0
    %1358 = vmatprep.subr.mxu0 0.0
    %1359 = vmatpush1.msra.mxu0 0.0
    %1360 = vmatprep.subr.mxu0 0.0
    %1361 = vmatpush1.msra.mxu0 0.0
    %1362 = vmatprep.mubr.f32.mxu0 0.0
    %1363 = vmatmul.mubr.f32.gmra.mrb[0].mxu0 %v1296
    %v1364 = vpop.f32.mrb[0].mxu0
    %v1365 = vadd.f32 0.0, %v1364
    %v1366 = vpop.f32.mrb[0].mxu0
    %1367 = vdwg.mxu0
    %v1368 = vadd.f32 %v599, %v1365
    %v1369 = vxor.u32 %v1368, 2147483648
    %v1370 = vmul.f32 %v1369, 1.442695
    %v1371 = vpow.pop %v1370
    %v1372 = vadd.f32 %v1371, 1.0
    %v1373 = vrcp.pop %v1372
    %v1374 = vmul.f32 1.0, %v1373
    %v1375 = vadd.f32 %v1365, %v758
    %1377 = vrot.lane.b32.xlu0 %v1375, 64
    %v1378 = vpop.permute.xlu0 %1377
    %v1380 = vmul.f32 %v1374, %v1378
    %1382 = vrot.lane.b32.xlu0 %v1380, 64
    %v1383 = vpop.permute.xlu0 %1382
    %v1385 = vadd.f32 %v599, %v1383
    %v1386 = vtanh.pop %v1385
    %v1387 = vsub.f32 1.0, %v1374
    %1389 = vrot.lane.b32.xlu0 %v1386, 96
    %v1390 = vpop.permute.xlu0 %1389
    %v1392 = vmul.f32 %v1387, %v1390
    %v1393 = vmul.f32 %v1374, %v1292
    %v1394 = vadd.f32 %v1392, %v1393
    %1396 = vrot.lane.b32.xlu0 %v1394, 96
    %v1397 = vpop.permute.xlu0 %1396
    %v1398 = vsel %vm676, %v1397, 0
    %1400 = vmatprep.subr.mxu0 0.0
    %1401 = vmatpush1.msra.mxu0 %v61
    %1402 = vmatprep.subr.mxu0 0.0
    %1403 = vmatpush1.msra.mxu0 %v62
    %1404 = vmatprep.subr.mxu0 0.0
    %1405 = vmatpush1.msra.mxu0 %v63
    %1406 = vmatprep.subr.mxu0 0.0
    %1407 = vmatpush1.msra.mxu0 %v64
    %1408 = vmatprep.subr.mxu0 0.0
    %1409 = vmatpush1.msra.mxu0 0.0
    %1410 = vmatprep.subr.mxu0 0.0
    %1411 = vmatpush1.msra.mxu0 0.0
    %1412 = vmatprep.subr.mxu0 0.0
    %1413 = vmatpush1.msra.mxu0 0.0
    %1414 = vmatprep.subr.mxu0 0.0
    %1415 = vmatpush1.msra.mxu0 0.0
    %1416 = vmatprep.subr.mxu0 0.0
    %1417 = vmatpush1.msra.mxu0 0.0
    %1418 = vmatprep.subr.mxu0 0.0
    %1419 = vmatpush1.msra.mxu0 0.0
    %1420 = vmatprep.subr.mxu0 0.0
    %1421 = vmatpush1.msra.mxu0 0.0
    %1422 = vmatprep.subr.mxu0 0.0
    %1423 = vmatpush1.msra.mxu0 0.0
    %1424 = vmatprep.subr.mxu0 0.0
    %1425 = vmatpush1.msra.mxu0 0.0
    %1426 = vmatprep.subr.mxu0 0.0
    %1427 = vmatpush1.msra.mxu0 0.0
    %1428 = vmatprep.subr.mxu0 0.0
    %1429 = vmatpush1.msra.mxu0 0.0
    %1430 = vmatprep.subr.mxu0 0.0
    %1431 = vmatpush1.msra.mxu0 0.0
    %1432 = vmatprep.subr.mxu0 0.0
    %1433 = vmatpush1.msra.mxu0 0.0
    %1434 = vmatprep.subr.mxu0 0.0
    %1435 = vmatpush1.msra.mxu0 0.0
    %1436 = vmatprep.subr.mxu0 0.0
    %1437 = vmatpush1.msra.mxu0 0.0
    %1438 = vmatprep.subr.mxu0 0.0
    %1439 = vmatpush1.msra.mxu0 0.0
    %1440 = vmatprep.subr.mxu0 0.0
    %1441 = vmatpush1.msra.mxu0 0.0
    %1442 = vmatprep.subr.mxu0 0.0
    %1443 = vmatpush1.msra.mxu0 0.0
    %1444 = vmatprep.subr.mxu0 0.0
    %1445 = vmatpush1.msra.mxu0 0.0
    %1446 = vmatprep.subr.mxu0 0.0
    %1447 = vmatpush1.msra.mxu0 0.0
    %1448 = vmatprep.subr.mxu0 0.0
    %1449 = vmatpush1.msra.mxu0 0.0
    %1450 = vmatprep.subr.mxu0 0.0
    %1451 = vmatpush1.msra.mxu0 0.0
    %1452 = vmatprep.subr.mxu0 0.0
    %1453 = vmatpush1.msra.mxu0 0.0
    %1454 = vmatprep.subr.mxu0 0.0
    %1455 = vmatpush1.msra.mxu0 0.0
    %1456 = vmatprep.subr.mxu0 0.0
    %1457 = vmatpush1.msra.mxu0 0.0
    %1458 = vmatprep.subr.mxu0 0.0
    %1459 = vmatpush1.msra.mxu0 0.0
    %1460 = vmatprep.subr.mxu0 0.0
    %1461 = vmatpush1.msra.mxu0 0.0
    %1462 = vmatprep.subr.mxu0 0.0
    %1463 = vmatpush1.msra.mxu0 0.0
    %1464 = vmatprep.mubr.f32.mxu0 0.0
    %1465 = vmatmul.mubr.f32.gmra.mrb[0].mxu0 %v1398
    %v1466 = vpop.f32.mrb[0].mxu0
    %v1467 = vadd.f32 0.0, %v1466
    %v1468 = vpop.f32.mrb[0].mxu0
    %1469 = vdwg.mxu0
    %v1470 = vadd.f32 %v672, %v1467
    %v1471 = vxor.u32 %v1470, 2147483648
    %v1472 = vmul.f32 %v1471, 1.442695
    %v1473 = vpow.pop %v1472
    %v1474 = vadd.f32 %v1473, 1.0
    %v1475 = vrcp.pop %v1474
    %v1476 = vmul.f32 1.0, %v1475
    %v1477 = vadd.f32 %v1467, %v758
    %1479 = vrot.lane.b32.xlu0 %v1477, 64
    %v1480 = vpop.permute.xlu0 %1479
    %v1482 = vmul.f32 %v1476, %v1480
    %1484 = vrot.lane.b32.xlu0 %v1482, 64
    %v1485 = vpop.permute.xlu0 %1484
    %v1487 = vadd.f32 %v672, %v1485
    %v1488 = vtanh.pop %v1487
    %v1489 = vsub.f32 1.0, %v1476
    %1491 = vrot.lane.b32.xlu0 %v1488, 96
    %v1492 = vpop.permute.xlu0 %1491
    %v1494 = vmul.f32 %v1489, %v1492
    %v1495 = vmul.f32 %v1476, %v1394
    %v1496 = vadd.f32 %v1494, %v1495
    %v1497 = vld [vmem:[#allocation5] sm:$0xff]
    %v1498 = vld [vmem:[#allocation5 + $0x8] sm:$0xff]
    %v1499 = vld [vmem:[#allocation5 + $0x10] sm:$0xff]
    %v1500 = vld [vmem:[#allocation5 + $0x18] sm:$0xff]
    %v1501 = vld [vmem:[%s7] sm:$0x1]
    %v1503 = vlaneseq
    %v1504 = vshrl.u32 %v1503, 7
    %v1505 = vsub.s32 0, %v1504
    %v1506 = vrot.slane %v1501, %v1505
    %1509 = vrot.lane.b32.xlu0 %v1496, 96
    %v1510 = vpop.permute.xlu0 %1509
    %v1511 = vsel %vm676, %v1510, 0
    %1513 = vmatprep.subr.mxu0 0.0
    %1514 = vmatpush1.msra.mxu0 %v1497
    %1515 = vmatprep.subr.mxu0 0.0
    %1516 = vmatpush1.msra.mxu0 %v1498
    %1517 = vmatprep.subr.mxu0 0.0
    %1518 = vmatpush1.msra.mxu0 %v1499
    %1519 = vmatprep.subr.mxu0 0.0
    %1520 = vmatpush1.msra.mxu0 %v1500
    %1521 = vmatprep.subr.mxu0 0.0
    %1522 = vmatpush1.msra.mxu0 0.0
    %1523 = vmatprep.subr.mxu0 0.0
    %1524 = vmatpush1.msra.mxu0 0.0
    %1525 = vmatprep.subr.mxu0 0.0
    %1526 = vmatpush1.msra.mxu0 0.0
    %1527 = vmatprep.subr.mxu0 0.0
    %1528 = vmatpush1.msra.mxu0 0.0
    %1529 = vmatprep.subr.mxu0 0.0
    %1530 = vmatpush1.msra.mxu0 0.0
    %1531 = vmatprep.subr.mxu0 0.0
    %1532 = vmatpush1.msra.mxu0 0.0
    %1533 = vmatprep.subr.mxu0 0.0
    %1534 = vmatpush1.msra.mxu0 0.0
    %1535 = vmatprep.subr.mxu0 0.0
    %1536 = vmatpush1.msra.mxu0 0.0
    %1537 = vmatprep.subr.mxu0 0.0
    %1538 = vmatpush1.msra.mxu0 0.0
    %1539 = vmatprep.subr.mxu0 0.0
    %1540 = vmatpush1.msra.mxu0 0.0
    %1541 = vmatprep.subr.mxu0 0.0
    %1542 = vmatpush1.msra.mxu0 0.0
    %1543 = vmatprep.subr.mxu0 0.0
    %1544 = vmatpush1.msra.mxu0 0.0
    %1545 = vmatprep.subr.mxu0 0.0
    %1546 = vmatpush1.msra.mxu0 0.0
    %1547 = vmatprep.subr.mxu0 0.0
    %1548 = vmatpush1.msra.mxu0 0.0
    %1549 = vmatprep.subr.mxu0 0.0
    %1550 = vmatpush1.msra.mxu0 0.0
    %1551 = vmatprep.subr.mxu0 0.0
    %1552 = vmatpush1.msra.mxu0 0.0
    %1553 = vmatprep.subr.mxu0 0.0
    %1554 = vmatpush1.msra.mxu0 0.0
    %1555 = vmatprep.subr.mxu0 0.0
    %1556 = vmatpush1.msra.mxu0 0.0
    %1557 = vmatprep.subr.mxu0 0.0
    %1558 = vmatpush1.msra.mxu0 0.0
    %1559 = vmatprep.subr.mxu0 0.0
    %1560 = vmatpush1.msra.mxu0 0.0
    %1561 = vmatprep.subr.mxu0 0.0
    %1562 = vmatpush1.msra.mxu0 0.0
    %1563 = vmatprep.subr.mxu0 0.0
    %1564 = vmatpush1.msra.mxu0 0.0
    %1565 = vmatprep.subr.mxu0 0.0
    %1566 = vmatpush1.msra.mxu0 0.0
    %1567 = vmatprep.subr.mxu0 0.0
    %1568 = vmatpush1.msra.mxu0 0.0
    %1569 = vmatprep.subr.mxu0 0.0
    %1570 = vmatpush1.msra.mxu0 0.0
    %1571 = vmatprep.subr.mxu0 0.0
    %1572 = vmatpush1.msra.mxu0 0.0
    %1573 = vmatprep.subr.mxu0 0.0
    %1574 = vmatpush1.msra.mxu0 0.0
    %1575 = vmatprep.subr.mxu0 0.0
    %1576 = vmatpush1.msra.mxu0 0.0
    %1577 = vmatprep.mubr.f32.mxu0 0.0
    %1578 = vmatmul.mubr.f32.gmra.mrb[0].mxu0 %v1511
    %v1579 = vpop.f32.mrb[0].mxu0
    %v1580 = vadd.f32 %v1506, %v1579
    %v1581 = vpop.f32.mrb[0].mxu0
    %1582 = vdwg.mxu0
    %1583 = vst [vmem:[#allocation7] sm:$0x3] %v1580
    %v1584 = vxor.u32 %v1496, 2147483648
    %v1585 = vmul.f32 %v1584, 1.442695
    %v1586 = vpow.pop %v1585
    %v1587 = vadd.f32 %v1586, 1.0
    %v1588 = vrcp.pop %v1587
    %v1589 = vmul.f32 1.0, %v1588
    %1591 = vrot.lane.b32.xlu0 %v1589, 96
    %v1592 = vpop.permute.xlu0 %1591
    %vm1594 = vcmask 254976
    %1595 = vst.msk [vmem:[#allocation8] sm:$0x3] %vm1594, %v1592
    %1597 = vst.msk [vmem:[#allocation10] sm:$0x3] %vm1594, %v1510
    // Predicated region
    $region42: #{tpu_custom_call.1} parent=1 // pred_check
      _
    $region43: #{tpu_custom_call.1} parent=1 // pred_check_branch
      %1599 = sbr.rel (0) target = $region45
    $region44: #{tpu_custom_call.1} parent=1 // pred_region
      %s1601 = ssub.s32 32, 32
      %1602 = vsyncadd [#allocation4], %s1601
      %s1604 = sshll.u32 [#allocation7], 4
      %s1605 = int_to_ptr.vmem [resolvable:$true] %s1604
      %1607 = dma.vmem_to_hbm [thread:$0]  %s1605, 32, %s8, [#allocation4]
    $region45: #{tpu_custom_call.1} parent=1 // pred_fallthru
      _
    // Predicated region
    $region46: #{tpu_custom_call.1} parent=1 // pred_check
      _
    $region47: #{tpu_custom_call.1} parent=1 // pred_check_branch
      %1609 = sbr.rel (0) target = $region49
    $region48: #{tpu_custom_call.1} parent=1 // pred_region
      %s1611 = ssub.s32 32, 32
      %1612 = vsyncadd [#allocation9], %s1611
      %s1614 = sshll.u32 [#allocation8], 4
      %s1615 = int_to_ptr.vmem [resolvable:$true] %s1614
      %1617 = dma.vmem_to_hbm [thread:$0]  %s1615, 32, %s9, [#allocation9]
    $region49: #{tpu_custom_call.1} parent=1 // pred_fallthru
      _
    // Predicated region
    $region50: #{tpu_custom_call.1} parent=1 // pred_check
      _
    $region51: #{tpu_custom_call.1} parent=1 // pred_check_branch
      %1619 = sbr.rel (0) target = $region53
    $region52: #{tpu_custom_call.1} parent=1 // pred_region
      %s1621 = ssub.s32 32, 32
      %1622 = vsyncadd [#allocation9], %s1621
      %s1624 = sshll.u32 [#allocation10], 4
      %s1625 = int_to_ptr.vmem [resolvable:$true] %s1624
      %1627 = dma.vmem_to_hbm [thread:$0]  %s1625, 32, %s10, [#allocation9]
    $region53: #{tpu_custom_call.1} parent=1 // pred_fallthru
      _
    // Predicated region
    $region54: #{tpu_custom_call.1} parent=1 // pred_check
      _
    $region55: #{tpu_custom_call.1} parent=1 // pred_check_branch
      %1629 = sbr.rel (0) target = $region57
    $region56: #{tpu_custom_call.1} parent=1 // pred_region
      %1630 = dma.done [#allocation4], 32
    $region57: #{tpu_custom_call.1} parent=1 // pred_fallthru
      _
    // Predicated region
    $region58: #{tpu_custom_call.1} parent=1 // pred_check
      _
    $region59: #{tpu_custom_call.1} parent=1 // pred_check_branch
      %1632 = sbr.rel (0) target = $region61
    $region60: #{tpu_custom_call.1} parent=1 // pred_region
      %1633 = dma.done [#allocation9], 32
    $region61: #{tpu_custom_call.1} parent=1 // pred_fallthru
      _
    // Predicated region
    $region62: #{tpu_custom_call.1} parent=1 // pred_check
      _
    $region63: #{tpu_custom_call.1} parent=1 // pred_check_branch
      %1635 = sbr.rel (0) target = $region65
    $region64: #{tpu_custom_call.1} parent=1 // pred_region
      %1636 = dma.done [#allocation9], 32
    $region65: #{tpu_custom_call.1} parent=1 // pred_fallthru
      _
    %1637 = vsyncpa [#allocation3], 1
    %1638 = vsyncpa [#allocation6], 1
    %1639 = vsyncpa [#allocation4], 1
    %1640 = vsyncpa [#allocation9], 1

</llo_original>
